<compile_context>
chip_gen: v7x
topology: tpu7x:2x2x1
jax: 0.10.0
libtpu: 0.0.40
codegen_flags: <defaults>
</compile_context>

<pallas_src>
import functools

import jax
import jax.numpy as jnp
from jax.experimental import pallas as pl
from jax.experimental.pallas import tpu as pltpu

EPS = 1e-7            # GIoU eps
MAX_TILE_N = 8192     # anchors per grid step (multiple of 128), well within VMEM


def _round_up(x, m):
    return ((x + m - 1) // m) * m


# ----------------------------------------------------------------------------
# Pallas kernel: per-tile QFL sum + weighted GIoU-loss sum.
# ----------------------------------------------------------------------------
def _criterion_kernel(num_classes, cls_ref, box_ref, aux_ref, out_ref):
    x = cls_ref[...]                                        # (C, TN) f32 logits
    C, tn = x.shape

    lab = aux_ref[0:1, :]                                   # (1, TN) labels (f32)
    score = aux_ref[1:2, :]                                 # (1, TN) assign metrics
    not_masked = aux_ref[2:3, :]                            # (1, TN) 1.0 == keep

    lab_i = lab.astype(jnp.int32)
    is_fg = (lab_i >= 0) & (lab_i < num_classes)            # (1, TN)
    valid = jnp.where(lab_i >= 0, not_masked, 0.0)          # (1, TN) f32

    # ---- Quality Focal Loss (loss_labels), beta == 2 ----
    # Share a single exp across sigmoid and softplus to cut EUP pressure.
    ax = jnp.abs(x)
    e = jnp.exp(-ax)                                        # exp(-|x|) in (0, 1]
    inv1pe = pl.reciprocal(1.0 + e, approx=True)
    sig = jnp.where(x >= 0, inv1pe, e * inv1pe)             # sigmoid(x)
    softplus = jnp.maximum(x, 0.0) + jnp.log(1.0 + e)       # BCE_with_logits(x, 0)

    # background term: BCE(x, 0) * sigmoid(x)^2
    base = softplus * (sig * sig)
    # foreground term (used only at the target class):
    #   BCE(x, score) * (score - sigmoid(x))^2
    bce_s = softplus - x * score
    diff = score - sig
    pos_term = bce_s * (diff * diff)

    cls_ids = jax.lax.broadcasted_iota(jnp.int32, (C, tn), 0)
    is_pos_class = (cls_ids == lab_i) & is_fg               # (C, TN)
    ce = jnp.where(is_pos_class, pos_term, base) * valid    # (C, TN)
    cls_sum = jnp.sum(ce)                                   # scalar partial sum

    # ---- weighted GIoU loss (loss_bboxes), full-sublane formulation ----
    pb = box_ref[0:4, :]                                    # (4, TN) pred xyxy
    gb = box_ref[4:8, :]                                    # (4, TN) gt xyxy

    row4 = jax.lax.broadcasted_iota(jnp.int32, (4, tn), 0)
    is_lo = row4 < 2                                        # rows 0,1 = (x1, y1)
    mx = jnp.maximum(pb, gb)
    mn = jnp.minimum(pb, gb)
    inter_c = jnp.where(is_lo, mx, mn)                      # intersection corners
    enc_c = jnp.where(is_lo, mn, mx)                        # enclosing-box corners

    wh_p = pb[2:4, :] - pb[0:2, :]                          # (2, TN)
    wh_g = gb[2:4, :] - gb[0:2, :]
    wh_i = jnp.maximum(inter_c[2:4, :] - inter_c[0:2, :], 0.0)
    wh_e = jnp.maximum(enc_c[2:4, :] - enc_c[0:2, :], 0.0)

    area_p = wh_p[0:1, :] * wh_p[1:2, :]                    # (1, TN)
    area_g = wh_g[0:1, :] * wh_g[1:2, :]
    inter = wh_i[0:1, :] * wh_i[1:2, :]
    enclose = wh_e[0:1, :] * wh_e[1:2, :] + EPS
    union = area_p + area_g - inter + EPS
    iou = inter / union                                     # exact div (accuracy)
    giou = iou - (enclose - union) / enclose

    # NOTE: matches the reference module — foreground_idxs does NOT include the
    # padding mask; wrapper-added padding columns carry label == -1 (is_fg False).
    fg = is_fg.astype(jnp.float32)                          # (1, TN)
    reg_sum = jnp.sum((1.0 - giou) * score * fg)            # scalar partial sum

    # ---- tiny per-tile output block: row 0 = cls sum, row 1 = reg sum ----
    row8 = jax.lax.broadcasted_iota(jnp.int32, (8, 128), 0)
    out_ref[0] = jnp.where(row8 == 0, cls_sum,
                           jnp.where(row8 == 1, reg_sum, 0.0))


def criterion_partial_sums(cls_t, box_t, aux, num_classes, tn):
    """cls_t [C,N] f32, box_t [8,N] f32 (pred|gt), aux [3,N] f32.

    Returns a [num_tiles, 8, 128] f32 array with per-tile partial sums at
    [:, 0, 0] (QFL) and [:, 1, 0] (weighted GIoU loss).
    """
    C, N = cls_t.shape
    assert N % tn == 0 and tn % 128 == 0
    num_tiles = N // tn

    cost = pl.CostEstimate(
        flops=N * (16 * C + 80),
        transcendentals=N * C,
        bytes_accessed=(cls_t.size + box_t.size + aux.size
                        + num_tiles * 8 * 128) * 4)

    return pl.pallas_call(
        functools.partial(_criterion_kernel, num_classes),
        out_shape=jax.ShapeDtypeStruct((num_tiles, 8, 128), jnp.float32),
        grid_spec=pltpu.PrefetchScalarGridSpec(
            num_scalar_prefetch=0,
            grid=(num_tiles,),
            in_specs=[
                pl.BlockSpec((C, tn), lambda i: (0, i)),
                pl.BlockSpec((8, tn), lambda i: (0, i)),
                pl.BlockSpec((3, tn), lambda i: (0, i)),
            ],
            out_specs=pl.BlockSpec((1, 8, 128), lambda i: (i, 0, 0)),
        ),
        compiler_params=pltpu.CompilerParams(
            dimension_semantics=("parallel",)),
        cost_estimate=cost,
    )(cls_t, box_t, aux)


# ----------------------------------------------------------------------------
# SetCriterion glue (plain JAX): mirrors compute_loss / forward.
# ----------------------------------------------------------------------------
class SetCriterionPallas:
    def __init__(self, cfg, max_tile_n=MAX_TILE_N):
        self.cfg = cfg
        self.num_classes = cfg["num_classes"]
        self.weight_dict = {"loss_cls": cfg["loss_cls_weight"],
                            "loss_reg": cfg["loss_reg_weight"]}
        self.max_tile_n = max_tile_n

    @staticmethod
    def _flatten(outputs, assigned):
        C = outputs["pred_cls"].shape[-1]
        cls = outputs["pred_cls"].reshape(-1, C).astype(jnp.float32)     # (N, C)
        box = outputs["pred_box"].reshape(-1, 4).astype(jnp.float32)     # (N, 4)
        not_masked = (~outputs["mask"].reshape(-1)).astype(jnp.float32)  # (N,)
        labels = assigned["assigned_labels"].reshape(-1).astype(jnp.float32)
        gt = assigned["assigned_bboxes"].reshape(-1, 4).astype(jnp.float32)
        metrics = assigned["assign_metrics"].reshape(-1).astype(jnp.float32)
        return cls, box, gt, labels, metrics, not_masked

    def _losses(self, cls_sum, reg_sum, num_fgs):
        loss_cls = cls_sum / num_fgs
        loss_reg = reg_sum / num_fgs
        total = (loss_cls * self.weight_dict["loss_cls"]
                 + loss_reg * self.weight_dict["loss_reg"])
        return {"loss_cls": loss_cls, "loss_reg": loss_reg, "loss": total}

    def forward(self, outputs):
        C = self.num_classes
        cls_m, box_m, gt_m, lab_m, met_m, nm_m = self._flatten(
            outputs["outputs_o2m"], outputs["assigned_o2m"])
        cls_o, box_o, gt_o, lab_o, met_o, nm_o = self._flatten(
            outputs["outputs_o2o"], outputs["assigned_o2o"])

        n_m, n_o = cls_m.shape[0], cls_o.shape[0]
        # One big tile per branch whenever it fits (grid = 2 "parallel" steps);
        # never clamp the tile to the smaller branch.
        tn = min(self.max_tile_n, _round_up(max(n_m, n_o), 128))
        tiles_m = -(-n_m // tn)
        tiles_o = -(-n_o // tn)
        pad_m = tiles_m * tn - n_m
        pad_o = tiles_o * tn - n_o

        def fuse_cols(a_m, a_o):
            rows = a_m.shape[0]
            return jnp.concatenate(
                [a_m, jnp.zeros((rows, pad_m), a_m.dtype),
                 a_o, jnp.zeros((rows, pad_o), a_o.dtype)], axis=1)

        def fuse_1d(a_m, a_o, pad_val):
            return jnp.concatenate(
                [a_m, jnp.full((pad_m,), pad_val, a_m.dtype),
                 a_o, jnp.full((pad_o,), pad_val, a_o.dtype)])

        # lane-major layout plumbing: transpose per branch, then ONE concat that
        # also performs the zero padding (pred and gt boxes share one (8,N) slab).
        cls_t = fuse_cols(cls_m.T, cls_o.T)                                 # (C, Ntot)
        box_t = fuse_cols(jnp.concatenate([box_m.T, gt_m.T], axis=0),
                          jnp.concatenate([box_o.T, gt_o.T], axis=0))       # (8, Ntot)
        aux = jnp.stack([fuse_1d(lab_m, lab_o, -1.0),    # pad label -> ignore
                         fuse_1d(met_m, met_o, 0.0),
                         fuse_1d(nm_m, nm_o, 0.0)], axis=0)                 # (3, Ntot)

        parts = criterion_partial_sums(cls_t, box_t, aux, num_classes=C, tn=tn)
        cls_p = parts[:, 0, 0]                                              # (tiles,)
        reg_p = parts[:, 1, 0]

        # num_fgs = clamp(sum(assign_metrics) / world_size, min=1); world_size == 1.
        num_fgs_m = jnp.maximum(jnp.sum(met_m), 1.0)
        num_fgs_o = jnp.maximum(jnp.sum(met_o), 1.0)

        o2m = self._losses(jnp.sum(cls_p[:tiles_m]), jnp.sum(reg_p[:tiles_m]),
                           num_fgs_m)
        o2o = self._losses(jnp.sum(cls_p[tiles_m:]), jnp.sum(reg_p[tiles_m:]),
                           num_fgs_o)

        loss_dict = {"loss": o2o["loss"] + o2m["loss"]}
        for k, v in o2m.items():
            loss_dict["o2m_" + k] = v
        for k, v in o2o.items():
            loss_dict["o2o_" + k] = v
        return loss_dict


# ----------------------------------------------------------------------------
# Deterministic synthetic inputs + run.
# ----------------------------------------------------------------------------
def _rand_boxes(key, n):
    k1, k2 = jax.random.split(key)
    xy1 = jax.random.uniform(k1, (n, 2), minval=0.0, maxval=50.0)
    wh = jax.random.uniform(k2, (n, 2), minval=5.0, maxval=40.0)
    return jnp.concatenate([xy1, xy1 + wh], axis=-1)


def _make_branch(key, B, M, C):
    ks = jax.random.split(key, 6)
    N = B * M
    pred_cls = jax.random.normal(ks[0], (B, M, C), dtype=jnp.float32)
    pred_box = _rand_boxes(ks[1], N).reshape(B, M, 4)
    mask = jax.random.uniform(ks[2], (B, M)) < 0.1           # True == padded anchor
    # synthetic matcher output (see TODO(synk) above)
    labels = jax.random.randint(ks[3], (N,), 0, C + 1)       # C == background
    metrics = jax.random.uniform(ks[4], (N,)) * (labels < C).astype(jnp.float32)
    gt_boxes = _rand_boxes(ks[5], N)
    outputs = {"pred_cls": pred_cls, "pred_box": pred_box, "mask": mask}
    assigned = {"assigned_labels": labels,
                "assigned_bboxes": gt_boxes,
                "assign_metrics": metrics}
    return outputs, assigned


if __name__ == "__main__":
    cfg = {"num_classes": 8, "loss_cls_weight": 1.0, "loss_reg_weight": 2.0}
    B, M, C = 2, 1024, cfg["num_classes"]                    # 2048 anchors / branch

    key = jax.random.PRNGKey(0)
    k_o2m, k_o2o = jax.random.split(key)
    out_o2m, asg_o2m = _make_branch(k_o2m, B, M, C)
    out_o2o, asg_o2o = _make_branch(k_o2o, B, M, C)

    # One 2048-anchor tile per branch -> grid of exactly 2 "parallel" steps
    # (both v7x TensorCores busy; near-zero grid overhead on v5e/v6e).
    criterion = SetCriterionPallas(cfg)
    loss_dict = criterion.forward({
        "outputs_o2m": out_o2m, "assigned_o2m": asg_o2m,
        "outputs_o2o": out_o2o, "assigned_o2o": asg_o2o,
    })
    loss_dict = jax.tree_util.tree_map(jax.block_until_ready, loss_dict)

    # sanity: finite scalars
    for k, v in loss_dict.items():
        assert v.shape == () and bool(jnp.isfinite(v)), (k, v)
    print("KERNEL_OK")
</pallas_src>

<mosaic_0001>
module attributes {stable_mosaic.version = 11 : i64} {
  func.func @_criterion_kernel(%arg0: i32, %arg1: memref<8x2048xf32, #tpu.memory_space<vmem>>, %arg2: memref<8x2048xf32, #tpu.memory_space<vmem>>, %arg3: memref<3x2048xf32, #tpu.memory_space<vmem>>, %arg4: memref<1x8x128xf32, #tpu.memory_space<vmem>>) attributes {dimension_semantics = [#tpu.dimension_semantics<parallel>], iteration_bounds = array<i64: 2>, scalar_prefetch = 0 : i64, scratch_operands = 0 : i64, tpu.core_type = #tpu.core_type<tc>, window_params = [{transform_indices = @transform_0, window_bounds = array<i64: 8, 2048>}, {transform_indices = @transform_1, window_bounds = array<i64: 8, 2048>}, {transform_indices = @transform_2, window_bounds = array<i64: 3, 2048>}, {transform_indices = @transform_3, window_bounds = array<i64: 1, 8, 128>}]} {
    %c0 = arith.constant 0 : index
    %c0_0 = arith.constant 0 : index
    %0 = vector.load %arg1[%c0, %c0_0] : memref<8x2048xf32, #tpu.memory_space<vmem>>, vector<8x2048xf32>
    %c0_1 = arith.constant 0 : index
    %c0_2 = arith.constant 0 : index
    %1 = vector.load %arg3[%c0_1, %c0_2] : memref<3x2048xf32, #tpu.memory_space<vmem>>, vector<1x2048xf32>
    %c1 = arith.constant 1 : index
    %c0_3 = arith.constant 0 : index
    %2 = vector.load %arg3[%c1, %c0_3] : memref<3x2048xf32, #tpu.memory_space<vmem>>, vector<1x2048xf32>
    %c2 = arith.constant 2 : index
    %c0_4 = arith.constant 0 : index
    %3 = vector.load %arg3[%c2, %c0_4] : memref<3x2048xf32, #tpu.memory_space<vmem>>, vector<1x2048xf32>
    %4 = arith.fptosi %1 : vector<1x2048xf32> to vector<1x2048xi32>
    %c0_i32 = arith.constant 0 : i32
    %5 = vector.broadcast %c0_i32 : i32 to vector<1x2048xi32>
    %6 = arith.cmpi sge, %4, %5 : vector<1x2048xi32>
    %c8_i32 = arith.constant 8 : i32
    %7 = vector.broadcast %c8_i32 : i32 to vector<1x2048xi32>
    %8 = arith.cmpi slt, %4, %7 : vector<1x2048xi32>
    %9 = arith.andi %6, %8 : vector<1x2048xi1>
    %c0_i32_5 = arith.constant 0 : i32
    %10 = vector.broadcast %c0_i32_5 : i32 to vector<1x2048xi32>
    %11 = arith.cmpi sge, %4, %10 : vector<1x2048xi32>
    %cst = arith.constant 0.000000e+00 : f32
    %12 = vector.broadcast %cst : f32 to vector<1x2048xf32>
    %13 = arith.select %11, %3, %12 : vector<1x2048xi1>, vector<1x2048xf32>
    %14 = math.absf %0 : vector<8x2048xf32>
    %cst_6 = arith.constant 0.000000e+00 : f32
    %15 = vector.broadcast %cst_6 : f32 to vector<8x2048xf32>
    %16 = arith.subf %15, %14 : vector<8x2048xf32>
    %17 = math.exp %16 : vector<8x2048xf32>
    %cst_7 = arith.constant 1.000000e+00 : f32
    %18 = vector.broadcast %cst_7 : f32 to vector<8x2048xf32>
    %19 = arith.addf %18, %17 : vector<8x2048xf32>
    %20 = tpu.reciprocal %19 {approx = true} : vector<8x2048xf32> -> vector<8x2048xf32>
    %cst_8 = arith.constant 0.000000e+00 : f32
    %21 = vector.broadcast %cst_8 : f32 to vector<8x2048xf32>
    %22 = arith.cmpf oge, %0, %21 : vector<8x2048xf32>
    %23 = arith.mulf %17, %20 : vector<8x2048xf32>
    %24 = arith.select %22, %20, %23 : vector<8x2048xi1>, vector<8x2048xf32>
    %cst_9 = arith.constant 0.000000e+00 : f32
    %25 = vector.broadcast %cst_9 : f32 to vector<8x2048xf32>
    %26 = arith.maximumf %0, %25 : vector<8x2048xf32>
    %cst_10 = arith.constant 1.000000e+00 : f32
    %27 = vector.broadcast %cst_10 : f32 to vector<8x2048xf32>
    %28 = arith.addf %27, %17 : vector<8x2048xf32>
    %29 = math.log %28 : vector<8x2048xf32>
    %30 = arith.addf %26, %29 : vector<8x2048xf32>
    %31 = arith.mulf %24, %24 : vector<8x2048xf32>
    %32 = arith.mulf %30, %31 : vector<8x2048xf32>
    %33 = vector.broadcast %2 : vector<1x2048xf32> to vector<8x2048xf32>
    %34 = arith.mulf %0, %33 : vector<8x2048xf32>
    %35 = arith.subf %30, %34 : vector<8x2048xf32>
    %36 = vector.broadcast %2 : vector<1x2048xf32> to vector<8x2048xf32>
    %37 = arith.subf %36, %24 : vector<8x2048xf32>
    %38 = arith.mulf %37, %37 : vector<8x2048xf32>
    %39 = arith.mulf %35, %38 : vector<8x2048xf32>
    %40 = tpu.iota {dimensions = array<i32: 0>} : vector<8x2048xi32>
    %41 = vector.broadcast %4 : vector<1x2048xi32> to vector<8x2048xi32>
    %42 = arith.cmpi eq, %40, %41 : vector<8x2048xi32>
    %43 = vector.broadcast %9 : vector<1x2048xi1> to vector<8x2048xi1>
    %44 = arith.andi %42, %43 : vector<8x2048xi1>
    %45 = arith.select %44, %39, %32 : vector<8x2048xi1>, vector<8x2048xf32>
    %46 = vector.broadcast %13 : vector<1x2048xf32> to vector<8x2048xf32>
    %47 = arith.mulf %45, %46 : vector<8x2048xf32>
    %48 = vector.shape_cast %47 : vector<8x2048xf32> to vector<1x8x2048xf32>
    %cst_11 = arith.constant dense<0.000000e+00> : vector<1xf32>
    %49 = vector.multi_reduction <add>, %48, %cst_11 [1, 2] : vector<1x8x2048xf32> to vector<1xf32>
    %50 = vector.shape_cast %49 : vector<1xf32> to vector<1x1x1xf32>
    %51 = vector.extract %50[0, 0, 0] : f32 from vector<1x1x1xf32>
    %c0_12 = arith.constant 0 : index
    %c0_13 = arith.constant 0 : index
    %52 = vector.load %arg2[%c0_12, %c0_13] : memref<8x2048xf32, #tpu.memory_space<vmem>>, vector<4x2048xf32>
    %c4 = arith.constant 4 : index
    %c0_14 = arith.constant 0 : index
    %53 = vector.load %arg2[%c4, %c0_14] : memref<8x2048xf32, #tpu.memory_space<vmem>>, vector<4x2048xf32>
    %54 = tpu.iota {dimensions = array<i32: 0>} : vector<4x2048xi32>
    %c2_i32 = arith.constant 2 : i32
    %55 = vector.broadcast %c2_i32 : i32 to vector<4x2048xi32>
    %56 = arith.cmpi slt, %54, %55 : vector<4x2048xi32>
    %57 = arith.maximumf %52, %53 : vector<4x2048xf32>
    %58 = arith.minimumf %52, %53 : vector<4x2048xf32>
    %59 = arith.select %56, %57, %58 : vector<4x2048xi1>, vector<4x2048xf32>
    %60 = arith.select %56, %58, %57 : vector<4x2048xi1>, vector<4x2048xf32>
    %61 = vector.extract_strided_slice %52 {offsets = [2, 0], sizes = [2, 2048], strides = [1, 1]} : vector<4x2048xf32> to vector<2x2048xf32>
    %62 = vector.extract_strided_slice %52 {offsets = [0, 0], sizes = [2, 2048], strides = [1, 1]} : vector<4x2048xf32> to vector<2x2048xf32>
    %63 = arith.subf %61, %62 : vector<2x2048xf32>
    %64 = vector.extract_strided_slice %53 {offsets = [2, 0], sizes = [2, 2048], strides = [1, 1]} : vector<4x2048xf32> to vector<2x2048xf32>
    %65 = vector.extract_strided_slice %53 {offsets = [0, 0], sizes = [2, 2048], strides = [1, 1]} : vector<4x2048xf32> to vector<2x2048xf32>
    %66 = arith.subf %64, %65 : vector<2x2048xf32>
    %67 = vector.extract_strided_slice %59 {offsets = [2, 0], sizes = [2, 2048], strides = [1, 1]} : vector<4x2048xf32> to vector<2x2048xf32>
    %68 = vector.extract_strided_slice %59 {offsets = [0, 0], sizes = [2, 2048], strides = [1, 1]} : vector<4x2048xf32> to vector<2x2048xf32>
    %69 = arith.subf %67, %68 : vector<2x2048xf32>
    %cst_15 = arith.constant 0.000000e+00 : f32
    %70 = vector.broadcast %cst_15 : f32 to vector<2x2048xf32>
    %71 = arith.maximumf %69, %70 : vector<2x2048xf32>
    %72 = vector.extract_strided_slice %60 {offsets = [2, 0], sizes = [2, 2048], strides = [1, 1]} : vector<4x2048xf32> to vector<2x2048xf32>
    %73 = vector.extract_strided_slice %60 {offsets = [0, 0], sizes = [2, 2048], strides = [1, 1]} : vector<4x2048xf32> to vector<2x2048xf32>
    %74 = arith.subf %72, %73 : vector<2x2048xf32>
    %cst_16 = arith.constant 0.000000e+00 : f32
    %75 = vector.broadcast %cst_16 : f32 to vector<2x2048xf32>
    %76 = arith.maximumf %74, %75 : vector<2x2048xf32>
    %77 = vector.extract_strided_slice %63 {offsets = [0, 0], sizes = [1, 2048], strides = [1, 1]} : vector<2x2048xf32> to vector<1x2048xf32>
    %78 = vector.extract_strided_slice %63 {offsets = [1, 0], sizes = [1, 2048], strides = [1, 1]} : vector<2x2048xf32> to vector<1x2048xf32>
    %79 = arith.mulf %77, %78 : vector<1x2048xf32>
    %80 = vector.extract_strided_slice %66 {offsets = [0, 0], sizes = [1, 2048], strides = [1, 1]} : vector<2x2048xf32> to vector<1x2048xf32>
    %81 = vector.extract_strided_slice %66 {offsets = [1, 0], sizes = [1, 2048], strides = [1, 1]} : vector<2x2048xf32> to vector<1x2048xf32>
    %82 = arith.mulf %80, %81 : vector<1x2048xf32>
    %83 = vector.extract_strided_slice %71 {offsets = [0, 0], sizes = [1, 2048], strides = [1, 1]} : vector<2x2048xf32> to vector<1x2048xf32>
    %84 = vector.extract_strided_slice %71 {offsets = [1, 0], sizes = [1, 2048], strides = [1, 1]} : vector<2x2048xf32> to vector<1x2048xf32>
    %85 = arith.mulf %83, %84 : vector<1x2048xf32>
    %86 = vector.extract_strided_slice %76 {offsets = [0, 0], sizes = [1, 2048], strides = [1, 1]} : vector<2x2048xf32> to vector<1x2048xf32>
    %87 = vector.extract_strided_slice %76 {offsets = [1, 0], sizes = [1, 2048], strides = [1, 1]} : vector<2x2048xf32> to vector<1x2048xf32>
    %88 = arith.mulf %86, %87 : vector<1x2048xf32>
    %cst_17 = arith.constant 1.000000e-07 : f32
    %89 = vector.broadcast %cst_17 : f32 to vector<1x2048xf32>
    %90 = arith.addf %88, %89 : vector<1x2048xf32>
    %91 = arith.addf %79, %82 : vector<1x2048xf32>
    %92 = arith.subf %91, %85 : vector<1x2048xf32>
    %cst_18 = arith.constant 1.000000e-07 : f32
    %93 = vector.broadcast %cst_18 : f32 to vector<1x2048xf32>
    %94 = arith.addf %92, %93 : vector<1x2048xf32>
    %95 = arith.divf %85, %94 : vector<1x2048xf32>
    %96 = arith.subf %90, %94 : vector<1x2048xf32>
    %97 = arith.divf %96, %90 : vector<1x2048xf32>
    %98 = arith.subf %95, %97 : vector<1x2048xf32>
    %99 = arith.extui %9 : vector<1x2048xi1> to vector<1x2048xi32>
    %100 = arith.sitofp %99 : vector<1x2048xi32> to vector<1x2048xf32>
    %cst_19 = arith.constant 1.000000e+00 : f32
    %101 = vector.broadcast %cst_19 : f32 to vector<1x2048xf32>
    %102 = arith.subf %101, %98 : vector<1x2048xf32>
    %103 = arith.mulf %102, %2 : vector<1x2048xf32>
    %104 = arith.mulf %103, %100 : vector<1x2048xf32>
    %105 = vector.shape_cast %104 : vector<1x2048xf32> to vector<1x1x2048xf32>
    %cst_20 = arith.constant dense<0.000000e+00> : vector<1xf32>
    %106 = vector.multi_reduction <add>, %105, %cst_20 [1, 2] : vector<1x1x2048xf32> to vector<1xf32>
    %107 = vector.shape_cast %106 : vector<1xf32> to vector<1x1x1xf32>
    %108 = vector.extract %107[0, 0, 0] : f32 from vector<1x1x1xf32>
    %109 = tpu.iota {dimensions = array<i32: 0>} : vector<8x128xi32>
    %c0_i32_21 = arith.constant 0 : i32
    %110 = vector.broadcast %c0_i32_21 : i32 to vector<8x128xi32>
    %111 = arith.cmpi eq, %109, %110 : vector<8x128xi32>
    %c1_i32 = arith.constant 1 : i32
    %112 = vector.broadcast %c1_i32 : i32 to vector<8x128xi32>
    %113 = arith.cmpi eq, %109, %112 : vector<8x128xi32>
    %cst_22 = arith.constant 0.000000e+00 : f32
    %114 = vector.broadcast %108 : f32 to vector<8x128xf32>
    %115 = vector.broadcast %cst_22 : f32 to vector<8x128xf32>
    %116 = arith.select %113, %114, %115 : vector<8x128xi1>, vector<8x128xf32>
    %117 = vector.broadcast %51 : f32 to vector<8x128xf32>
    %118 = arith.select %111, %117, %116 : vector<8x128xi1>, vector<8x128xf32>
    %c0_23 = arith.constant 0 : index
    %c0_24 = arith.constant 0 : index
    %c0_25 = arith.constant 0 : index
    %119 = vector.load %arg4[%c0_23, %c0_24, %c0_25] : memref<1x8x128xf32, #tpu.memory_space<vmem>>, vector<1x8x128xf32>
    %120 = vector.shape_cast %119 : vector<1x8x128xf32> to vector<8x128xf32>
    %121 = vector.shape_cast %118 : vector<8x128xf32> to vector<1x8x128xf32>
    tpu.vector_store %arg4[%c0_23, %c0_24, %c0_25], %121 {strides = array<i32>} : memref<1x8x128xf32, #tpu.memory_space<vmem>>, vector<1x8x128xf32>,
    return
  }
  func.func @transform_0(%arg0: i32) -> (i32, i32) {
    %c0_i32 = arith.constant 0 : i32
    %c0_i32_0 = arith.constant 0 : i32
    return %c0_i32, %arg0 : i32, i32
  }
  func.func @transform_1(%arg0: i32) -> (i32, i32) {
    %c0_i32 = arith.constant 0 : i32
    %c0_i32_0 = arith.constant 0 : i32
    return %c0_i32, %arg0 : i32, i32
  }
  func.func @transform_2(%arg0: i32) -> (i32, i32) {
    %c0_i32 = arith.constant 0 : i32
    %c0_i32_0 = arith.constant 0 : i32
    return %c0_i32, %arg0 : i32, i32
  }
  func.func @transform_3(%arg0: i32) -> (i32, i32, i32) {
    %c0_i32 = arith.constant 0 : i32
    %c0_i32_0 = arith.constant 0 : i32
    %c0_i32_1 = arith.constant 0 : i32
    return %arg0, %c0_i32, %c0_i32_0 : i32, i32, i32
  }
}

</mosaic_0001>

<llo_original>
// kernel: tpu_custom_call.1
$region0: #{tpu_custom_call.1}
  #allocation0 [shape = 'u32[]', space=smem, size = 0x4, offset = 0x4, fixed_abs, tag = 'smem constant byte address 0x4 - core index']
  #allocation1 [shape = 'u32[144,128]{1,0:T(1,128)}', space=vmem, size = 0x12000, scoped, tag = 'internal scratch']
  %s0 = inlined_call_operand.hbm [shape: f32[8,4096], index: 0, kind: input, shape index: {}]
  %s1 = inlined_call_operand.hbm [shape: f32[8,4096], index: 1, kind: input, shape index: {}]
  %s2 = inlined_call_operand.hbm [shape: f32[3,4096], index: 2, kind: input, shape index: {}]
  %s3 = inlined_call_operand.hbm [shape: f32[2,8,128], index: 3, kind: output, shape index: {}]
  %s4 = sld [smem:[#allocation0]]
  $region57: #{tpu_custom_call.1} parent=0
    _
  %s6 = ssub.s32 1, %s4
  %s7 = scalar_select 0, %s6, %s4
  $region1: #{tpu_custom_call.1} parent=0
    #allocation2 [shape = 'u8[131072]{0}', space=vmem, size = 0x20000, scoped, tag = 'input window, operand 0']
    #allocation3 [shape = 's32[2]{0}', space=sflag, size = 0x8, scoped, tag = 'scoped memory for tpu_custom_call.1']
    #allocation4 [shape = 's32[2]{0}', space=sflag, size = 0x8, scoped, tag = 'scoped memory for tpu_custom_call.1']
    #allocation5 [shape = 'u8[131072]{0}', space=vmem, size = 0x20000, scoped, tag = 'input window, operand 1']
    #allocation6 [shape = 's32[2]{0}', space=sflag, size = 0x8, scoped, tag = 'scoped memory for tpu_custom_call.1']
    #allocation7 [shape = 'u8[65536]{0}', space=vmem, size = 0x10000, scoped, tag = 'input window, operand 2']
    #allocation8 [shape = 'u8[8192]{0}', space=vmem, size = 0x2000, scoped, tag = 'output window, operand 0']
    %8 = vsyncpa [#allocation3], 0
    %s9 = scalar_lea.sflag [#allocation3], 1
    %10 = vsyncpa %s9, 0
    %11 = vsyncpa [#allocation6], 0
    %s12 = scalar_lea.sflag [#allocation6], 1
    %13 = vsyncpa %s12, 0
    %14 = vsyncpa [#allocation4], 0
    %s15 = scalar_lea.sflag [#allocation4], 1
    %16 = vsyncpa %s15, 0
    loop: start=0, step=1, limit=4
    $region2: #{tpu_custom_call.1} parent=1 // loop_pre_header
      _
    $region3: #{tpu_custom_call.1} parent=1 // loop_header
      %s18 = sphi 0, %s22
      %p19 = scmp.ge.s32.totalorder %s18, 4
      %s28 = sphi 0, %s30
      %s31 = sphi 0, %s28
      %s32 = sphi 0, %s31
      %s48 = sphi 0, %s32
      %s54 = sphi 0, %s56
      %s57 = sphi 0, %s54
      %s58 = sphi 0, %s57
      %s74 = sphi 0, %s58
      %s80 = sphi 0, %s82
      %s83 = sphi 0, %s80
      %s84 = sphi 0, %s83
      %s100 = sphi 0, %s84
      %s106 = sphi 0, %s108
      %s109 = sphi 0, %s106
      %s110 = sphi 0, %s109
      %s126 = sphi 0, %s110
    $region4: #{tpu_custom_call.1} parent=1 // loop_header_branch
      %21 = sbr.rel (%p19) target = $region8
    $region5: #{tpu_custom_call.1} parent=1 // loop_body
      %s23 = ssub.s32 %s18, 1
      %s24 = ssub.s32 %s18, 2
      %s25 = sadd.s32 %s18, 1
      %s26 = ssub.s32 %s18, %s25
      %p27 = scmp.eq.s32.totalorder %s26, 0
      %s29 = sadd.s32 %s28, 1
      %s30 = scalar_select %p27, %s28, %s29
      %p33 = pneg %p27
      %p34 = scmp.eq.s32.totalorder %s18, 1
      %p35 = por %p33, %p34
      %p36 = scmp.ne.s32.totalorder %s28, %s31
      %p37 = scmp.eq.s32.totalorder %s18, 0
      %p38 = por %p36, %p37
      %p39 = scmp.ne.s32.totalorder %s28, %s31
      %p40 = scmp.eq.s32.totalorder %s23, 1
      %p41 = por %p39, %p40
      %p42 = scmp.ne.s32.totalorder %s31, %s32
      %p43 = scmp.eq.s32.totalorder %s23, 0
      %p44 = por %p42, %p43
      %p45 = scmp.ne.s32.totalorder %s31, %s32
      %p46 = scmp.eq.s32.totalorder %s24, 1
      %p47 = por %p45, %p46
      %p49 = scmp.ne.s32.totalorder %s32, %s48
      %p50 = scmp.eq.s32.totalorder %s24, 0
      %p51 = por %p49, %p50
      %s52 = ssub.s32 %s18, %s25
      %p53 = scmp.eq.s32.totalorder %s52, 0
      %s55 = sadd.s32 %s54, 1
      %s56 = scalar_select %p53, %s54, %s55
      %p59 = pneg %p53
      %p60 = scmp.eq.s32.totalorder %s18, 1
      %p61 = por %p59, %p60
      %p62 = scmp.ne.s32.totalorder %s54, %s57
      %p63 = scmp.eq.s32.totalorder %s18, 0
      %p64 = por %p62, %p63
      %p65 = scmp.ne.s32.totalorder %s54, %s57
      %p66 = scmp.eq.s32.totalorder %s23, 1
      %p67 = por %p65, %p66
      %p68 = scmp.ne.s32.totalorder %s57, %s58
      %p69 = scmp.eq.s32.totalorder %s23, 0
      %p70 = por %p68, %p69
      %p71 = scmp.ne.s32.totalorder %s57, %s58
      %p72 = scmp.eq.s32.totalorder %s24, 1
      %p73 = por %p71, %p72
      %p75 = scmp.ne.s32.totalorder %s58, %s74
      %p76 = scmp.eq.s32.totalorder %s24, 0
      %p77 = por %p75, %p76
      %s78 = ssub.s32 %s18, %s25
      %p79 = scmp.eq.s32.totalorder %s78, 0
      %s81 = sadd.s32 %s80, 1
      %s82 = scalar_select %p79, %s80, %s81
      %p85 = pneg %p79
      %p86 = scmp.eq.s32.totalorder %s18, 1
      %p87 = por %p85, %p86
      %p88 = scmp.ne.s32.totalorder %s80, %s83
      %p89 = scmp.eq.s32.totalorder %s18, 0
      %p90 = por %p88, %p89
      %p91 = scmp.ne.s32.totalorder %s80, %s83
      %p92 = scmp.eq.s32.totalorder %s23, 1
      %p93 = por %p91, %p92
      %p94 = scmp.ne.s32.totalorder %s83, %s84
      %p95 = scmp.eq.s32.totalorder %s23, 0
      %p96 = por %p94, %p95
      %p97 = scmp.ne.s32.totalorder %s83, %s84
      %p98 = scmp.eq.s32.totalorder %s24, 1
      %p99 = por %p97, %p98
      %p101 = scmp.ne.s32.totalorder %s84, %s100
      %p102 = scmp.eq.s32.totalorder %s24, 0
      %p103 = por %p101, %p102
      %s104 = ssub.s32 %s18, %s25
      %p105 = scmp.eq.s32.totalorder %s104, 0
      %s107 = sadd.s32 %s106, 1
      %s108 = scalar_select %p105, %s106, %s107
      %p111 = pneg %p105
      %p112 = scmp.eq.s32.totalorder %s18, 1
      %p113 = por %p111, %p112
      %p114 = scmp.ne.s32.totalorder %s106, %s109
      %p115 = scmp.eq.s32.totalorder %s18, 0
      %p116 = por %p114, %p115
      %p117 = scmp.ne.s32.totalorder %s106, %s109
      %p118 = scmp.eq.s32.totalorder %s23, 1
      %p119 = por %p117, %p118
      %p120 = scmp.ne.s32.totalorder %s109, %s110
      %p121 = scmp.eq.s32.totalorder %s23, 0
      %p122 = por %p120, %p121
      %p123 = scmp.ne.s32.totalorder %s109, %s110
      %p124 = scmp.eq.s32.totalorder %s24, 1
      %p125 = por %p123, %p124
      %p127 = scmp.ne.s32.totalorder %s110, %s126
      %p128 = scmp.eq.s32.totalorder %s24, 0
      %p129 = por %p127, %p128
      %p130 = scmp.le.s32.totalorder 1, %s18
      %p131 = scmp.lt.s32.totalorder %s18, 3
      %p132 = pnand %p130, %p131
      %p133 = pneg %p132
      // Predicated region
      $region9: #{tpu_custom_call.1} parent=5 // pred_check
        _
      $region10: #{tpu_custom_call.1} parent=5 // pred_check_branch
        %135 = sbr.rel (%p132) target = $region12
      $region11: #{tpu_custom_call.1} parent=5 // pred_region
        %s136 = ssub.s32 %s18, 1
      $region12: #{tpu_custom_call.1} parent=5 // pred_fallthru
        _
      %p137 = scmp.lt.s32.totalorder %s18, 2
      // Predicated region
      $region13: #{tpu_custom_call.1} parent=5 // pred_check
        %p138 = pneg %p137
      $region14: #{tpu_custom_call.1} parent=5 // pred_check_branch
        %140 = sbr.rel (%p138) target = $region16
      $region15: #{tpu_custom_call.1} parent=5 // pred_region
        // Predicated region
        $region17: #{tpu_custom_call.1} parent=15 // pred_check
          %p141 = pneg %p38
        $region18: #{tpu_custom_call.1} parent=15 // pred_check_branch
          %143 = sbr.rel (%p141) target = $region20
        $region19: #{tpu_custom_call.1} parent=15 // pred_region
          %s144 = sand.u32 %s28, 1
          %s145 = scalar_lea.sflag [#allocation3], %s144
          %s146 = sand.u32 %s28, 1
          %s147 = smul.addr %s146, 128
          %s148 = scalar_lea.vmem [#allocation2], %s147
          %s149 = smul.u32 16, %s18
          %s151 = ssub.s32 2048, 2048
          %152 = vsyncadd %s145, %s151
          %s153 = smul.addr %s149, 128
          %s154 = scalar_lea.hbm %s0, %s153
          %s156 = sshll.u32 %s148, 4
          %s157 = int_to_ptr.vmem [resolvable:$true] %s156
          %159 = dma.hbm_to_vmem [thread:$0]  %s154, 2048, %s157, %s145
        $region20: #{tpu_custom_call.1} parent=15 // pred_fallthru
          _
        // Predicated region
        $region21: #{tpu_custom_call.1} parent=15 // pred_check
          %p160 = pneg %p64
        $region22: #{tpu_custom_call.1} parent=15 // pred_check_branch
          %162 = sbr.rel (%p160) target = $region24
        $region23: #{tpu_custom_call.1} parent=15 // pred_region
          %s163 = sand.u32 %s18, 1
          %s164 = scalar_lea.sflag [#allocation6], %s163
          %s165 = sand.u32 %s54, 1
          %s166 = smul.addr %s165, 128
          %s167 = scalar_lea.vmem [#allocation5], %s166
          %s168 = smul.u32 16, %s18
          %s170 = ssub.s32 2048, 2048
          %171 = vsyncadd %s164, %s170
          %s172 = smul.addr %s168, 128
          %s173 = scalar_lea.hbm %s1, %s172
          %s175 = sshll.u32 %s167, 4
          %s176 = int_to_ptr.vmem [resolvable:$true] %s175
          %178 = dma.hbm_to_vmem [thread:$0]  %s173, 2048, %s176, %s164
        $region24: #{tpu_custom_call.1} parent=15 // pred_fallthru
          _
        // Predicated region
        $region25: #{tpu_custom_call.1} parent=15 // pred_check
          %p179 = pneg %p90
        $region26: #{tpu_custom_call.1} parent=15 // pred_check_branch
          %181 = sbr.rel (%p179) target = $region28
        $region27: #{tpu_custom_call.1} parent=15 // pred_region
          %s182 = sand.u32 %s18, 1
          %s183 = scalar_lea.sflag [#allocation6], %s182
          %s184 = sand.u32 %s80, 1
          %s185 = smul.addr %s184, 64
          %s186 = scalar_lea.vmem [#allocation7], %s185
          %s187 = smul.u32 16, %s18
          %s189 = ssub.s32 1024, 1024
          %190 = vsyncadd %s183, %s189
          %s191 = smul.addr %s187, 64
          %s192 = scalar_lea.hbm %s2, %s191
          %s194 = sshll.u32 %s186, 4
          %s195 = int_to_ptr.vmem [resolvable:$true] %s194
          %197 = dma.hbm_to_vmem [thread:$0]  %s192, 1024, %s195, %s183
        $region28: #{tpu_custom_call.1} parent=15 // pred_fallthru
          _
      $region16: #{tpu_custom_call.1} parent=5 // pred_fallthru
        _
      %p198 = scmp.le.s32.totalorder 1, %s18
      %p199 = scmp.lt.s32.totalorder %s18, 3
      %p200 = pnand %p198, %p199
      %p201 = pneg %p200
      // Predicated region
      $region29: #{tpu_custom_call.1} parent=5 // pred_check
        _
      $region30: #{tpu_custom_call.1} parent=5 // pred_check_branch
        %203 = sbr.rel (%p200) target = $region32
      $region31: #{tpu_custom_call.1} parent=5 // pred_region
        %s204 = ssub.s32 %s18, 1
        %s205 = sand.u32 %s31, 1
        %s206 = scalar_lea.sflag [#allocation3], %s205
        %s207 = sand.u32 %s31, 1
        %s208 = smul.addr %s207, 128
        %s209 = scalar_lea.vmem [#allocation2], %s208
        // Predicated region
        $region33: #{tpu_custom_call.1} parent=31 // pred_check
          %p210 = pneg %p44
        $region34: #{tpu_custom_call.1} parent=31 // pred_check_branch
          %212 = sbr.rel (%p210) target = $region36
        $region35: #{tpu_custom_call.1} parent=31 // pred_region
          %213 = dma.done %s206, 2048
        $region36: #{tpu_custom_call.1} parent=31 // pred_fallthru
          _
        %s214 = sand.u32 %s23, 1
        %s215 = scalar_lea.sflag [#allocation6], %s214
        %s216 = sand.u32 %s57, 1
        %s217 = smul.addr %s216, 128
        %s218 = scalar_lea.vmem [#allocation5], %s217
        // Predicated region
        $region37: #{tpu_custom_call.1} parent=31 // pred_check
          %p219 = pneg %p70
        $region38: #{tpu_custom_call.1} parent=31 // pred_check_branch
          %221 = sbr.rel (%p219) target = $region40
        $region39: #{tpu_custom_call.1} parent=31 // pred_region
          %222 = dma.done %s215, 2048
        $region40: #{tpu_custom_call.1} parent=31 // pred_fallthru
          _
        %s223 = sand.u32 %s23, 1
        %s224 = scalar_lea.sflag [#allocation6], %s223
        %s225 = sand.u32 %s83, 1
        %s226 = smul.addr %s225, 64
        %s227 = scalar_lea.vmem [#allocation7], %s226
        // Predicated region
        $region41: #{tpu_custom_call.1} parent=31 // pred_check
          %p228 = pneg %p96
        $region42: #{tpu_custom_call.1} parent=31 // pred_check_branch
          %230 = sbr.rel (%p228) target = $region44
        $region43: #{tpu_custom_call.1} parent=31 // pred_region
          %231 = dma.done %s224, 1024
        $region44: #{tpu_custom_call.1} parent=31 // pred_fallthru
          _
        %s232 = sand.u32 %s31, 1
        %s233 = scalar_lea.sflag [#allocation3], %s232
        %s234 = sand.u32 %s31, 1
        %s235 = smul.addr %s234, 128
        %s236 = scalar_lea.vmem [#allocation2], %s235
        %p237 = pneg %p44
        %p238 = pneg %p41
        %s239 = sand.u32 %s23, 1
        %s240 = scalar_lea.sflag [#allocation6], %s239
        %s241 = sand.u32 %s57, 1
        %s242 = smul.addr %s241, 128
        %s243 = scalar_lea.vmem [#allocation5], %s242
        %p244 = pneg %p70
        %p245 = pneg %p67
        %s246 = sand.u32 %s23, 1
        %s247 = scalar_lea.sflag [#allocation6], %s246
        %s248 = sand.u32 %s83, 1
        %s249 = smul.addr %s248, 64
        %s250 = scalar_lea.vmem [#allocation7], %s249
        %p251 = pneg %p96
        %p252 = pneg %p93
        %p253 = pneg %p122
        %p254 = pneg %p119
        %s255 = sand.u32 %s109, 1
        %s256 = scalar_lea.sflag [#allocation4], %s255
        %s257 = sand.u32 %s109, 1
        %s258 = smul.addr %s257, 8
        %s259 = scalar_lea.vmem [#allocation8], %s258
        %s260 = smul.u32 16, %s23
        %s261 = smul.u32 16, %s23
        %s262 = smul.u32 16, %s23
        %v263 = vld [vmem:[%s209] sm:$0xff]
        %v264 = vld [vmem:[%s209 + $0x8] sm:$0xff]
        %v265 = vld [vmem:[%s209 + $0x10] sm:$0xff]
        %v266 = vld [vmem:[%s209 + $0x18] sm:$0xff]
        %v267 = vld [vmem:[%s209 + $0x20] sm:$0xff]
        %v268 = vld [vmem:[%s209 + $0x28] sm:$0xff]
        %v269 = vld [vmem:[%s209 + $0x30] sm:$0xff]
        %v270 = vld [vmem:[%s209 + $0x38] sm:$0xff]
        %v271 = vld [vmem:[%s209 + $0x40] sm:$0xff]
        %v272 = vld [vmem:[%s209 + $0x48] sm:$0xff]
        %v273 = vld [vmem:[%s209 + $0x50] sm:$0xff]
        %v274 = vld [vmem:[%s209 + $0x58] sm:$0xff]
        %v275 = vld [vmem:[%s209 + $0x60] sm:$0xff]
        %v276 = vld [vmem:[%s209 + $0x68] sm:$0xff]
        %v277 = vld [vmem:[%s209 + $0x70] sm:$0xff]
        %v278 = vld [vmem:[%s209 + $0x78] sm:$0xff]
        %v279 = vld [vmem:[%s227] ss:$4 sm:$0xff]
        %s280 = scalar_lea.vmem %s227, 32 [#allocation7]
        %v281 = vld [vmem:[%s280] ss:$4 sm:$0xff]
        %s282 = scalar_lea.vmem %s227, 1 [#allocation7]
        %v283 = vld [vmem:[%s282] ss:$4 sm:$0xff]
        %s284 = scalar_lea.vmem %s227, 33 [#allocation7]
        %v285 = vld [vmem:[%s284] ss:$4 sm:$0xff]
        %s286 = scalar_lea.vmem %s227, 2 [#allocation7]
        %v287 = vld [vmem:[%s286] ss:$4 sm:$0xff]
        %s288 = scalar_lea.vmem %s227, 34 [#allocation7]
        %v289 = vld [vmem:[%s288] ss:$4 sm:$0xff]
        %v290 = vcvt.f32.s32.to.zero.pseudo %v279
        %v291 = vcvt.f32.s32.to.zero.pseudo %v281
        %vm292 = vcmp.ge.s32.totalorder %v290, 0
        %vm293 = vcmp.ge.s32.totalorder %v291, 0
        %vm294 = vcmp.lt.s32.totalorder %v290, 8
        %vm295 = vcmp.lt.s32.totalorder %v291, 8
        %vm296 = vmand %vm292, %vm294
        %vm297 = vmand %vm293, %vm295
        %v298 = vsel %vm292, %v287, 0.0
        %v299 = vsel %vm293, %v289, 0.0
        %v300 = vand.u32 2147483647, %v263
        %v301 = vand.u32 2147483647, %v264
        %v302 = vand.u32 2147483647, %v265
        %v303 = vand.u32 2147483647, %v266
        %v304 = vand.u32 2147483647, %v267
        %v305 = vand.u32 2147483647, %v268
        %v306 = vand.u32 2147483647, %v269
        %v307 = vand.u32 2147483647, %v270
        %v308 = vand.u32 2147483647, %v271
        %v309 = vand.u32 2147483647, %v272
        %v310 = vand.u32 2147483647, %v273
        %v311 = vand.u32 2147483647, %v274
        %v312 = vand.u32 2147483647, %v275
        %v313 = vand.u32 2147483647, %v276
        %v314 = vand.u32 2147483647, %v277
        %v315 = vand.u32 2147483647, %v278
        %v316 = vsub.f32 0.0, %v300
        %v317 = vsub.f32 0.0, %v301
        %v318 = vsub.f32 0.0, %v302
        %v319 = vsub.f32 0.0, %v303
        %v320 = vsub.f32 0.0, %v304
        %v321 = vsub.f32 0.0, %v305
        %v322 = vsub.f32 0.0, %v306
        %v323 = vsub.f32 0.0, %v307
        %v324 = vsub.f32 0.0, %v308
        %v325 = vsub.f32 0.0, %v309
        %v326 = vsub.f32 0.0, %v310
        %v327 = vsub.f32 0.0, %v311
        %v328 = vsub.f32 0.0, %v312
        %v329 = vsub.f32 0.0, %v313
        %v330 = vsub.f32 0.0, %v314
        %v331 = vsub.f32 0.0, %v315
        %v332 = vmul.f32 %v316, 1.442695
        %v333 = vpow.pop %v332
        %v334 = vmul.f32 %v317, 1.442695
        %v335 = vpow.pop %v334
        %v336 = vmul.f32 %v318, 1.442695
        %v337 = vpow.pop %v336
        %v338 = vmul.f32 %v319, 1.442695
        %v339 = vpow.pop %v338
        %v340 = vmul.f32 %v320, 1.442695
        %v341 = vpow.pop %v340
        %v342 = vmul.f32 %v321, 1.442695
        %v343 = vpow.pop %v342
        %v344 = vmul.f32 %v322, 1.442695
        %v345 = vpow.pop %v344
        %v346 = vmul.f32 %v323, 1.442695
        %v347 = vpow.pop %v346
        %v348 = vmul.f32 %v324, 1.442695
        %v349 = vpow.pop %v348
        %v350 = vmul.f32 %v325, 1.442695
        %v351 = vpow.pop %v350
        %v352 = vmul.f32 %v326, 1.442695
        %v353 = vpow.pop %v352
        %v354 = vmul.f32 %v327, 1.442695
        %v355 = vpow.pop %v354
        %v356 = vmul.f32 %v328, 1.442695
        %v357 = vpow.pop %v356
        %v358 = vmul.f32 %v329, 1.442695
        %v359 = vpow.pop %v358
        %v360 = vmul.f32 %v330, 1.442695
        %v361 = vpow.pop %v360
        %v362 = vmul.f32 %v331, 1.442695
        %v363 = vpow.pop %v362
        %v364 = vadd.f32 %v333, 1.0
        %v365 = vadd.f32 %v335, 1.0
        %v366 = vadd.f32 %v337, 1.0
        %v367 = vadd.f32 %v339, 1.0
        %v368 = vadd.f32 %v341, 1.0
        %v369 = vadd.f32 %v343, 1.0
        %v370 = vadd.f32 %v345, 1.0
        %v371 = vadd.f32 %v347, 1.0
        %v372 = vadd.f32 %v349, 1.0
        %v373 = vadd.f32 %v351, 1.0
        %v374 = vadd.f32 %v353, 1.0
        %v375 = vadd.f32 %v355, 1.0
        %v376 = vadd.f32 %v357, 1.0
        %v377 = vadd.f32 %v359, 1.0
        %v378 = vadd.f32 %v361, 1.0
        %v379 = vadd.f32 %v363, 1.0
        %v380 = vrcp.pop %v364
        %v381 = vrcp.pop %v365
        %v382 = vrcp.pop %v366
        %v383 = vrcp.pop %v367
        %v384 = vrcp.pop %v368
        %v385 = vrcp.pop %v369
        %v386 = vrcp.pop %v370
        %v387 = vrcp.pop %v371
        %v388 = vrcp.pop %v372
        %v389 = vrcp.pop %v373
        %v390 = vrcp.pop %v374
        %v391 = vrcp.pop %v375
        %v392 = vrcp.pop %v376
        %v393 = vrcp.pop %v377
        %v394 = vrcp.pop %v378
        %v395 = vrcp.pop %v379
        %vm396 = vcmp.ge.f32.partialorder %v263, 0.0
        %vm397 = vcmp.ge.f32.partialorder %v264, 0.0
        %vm398 = vcmp.ge.f32.partialorder %v265, 0.0
        %vm399 = vcmp.ge.f32.partialorder %v266, 0.0
        %vm400 = vcmp.ge.f32.partialorder %v267, 0.0
        %vm401 = vcmp.ge.f32.partialorder %v268, 0.0
        %vm402 = vcmp.ge.f32.partialorder %v269, 0.0
        %vm403 = vcmp.ge.f32.partialorder %v270, 0.0
        %vm404 = vcmp.ge.f32.partialorder %v271, 0.0
        %vm405 = vcmp.ge.f32.partialorder %v272, 0.0
        %vm406 = vcmp.ge.f32.partialorder %v273, 0.0
        %vm407 = vcmp.ge.f32.partialorder %v274, 0.0
        %vm408 = vcmp.ge.f32.partialorder %v275, 0.0
        %vm409 = vcmp.ge.f32.partialorder %v276, 0.0
        %vm410 = vcmp.ge.f32.partialorder %v277, 0.0
        %vm411 = vcmp.ge.f32.partialorder %v278, 0.0
        %v412 = vmul.f32 %v333, %v380
        %v413 = vmul.f32 %v335, %v381
        %v414 = vmul.f32 %v337, %v382
        %v415 = vmul.f32 %v339, %v383
        %v416 = vmul.f32 %v341, %v384
        %v417 = vmul.f32 %v343, %v385
        %v418 = vmul.f32 %v345, %v386
        %v419 = vmul.f32 %v347, %v387
        %v420 = vmul.f32 %v349, %v388
        %v421 = vmul.f32 %v351, %v389
        %v422 = vmul.f32 %v353, %v390
        %v423 = vmul.f32 %v355, %v391
        %v424 = vmul.f32 %v357, %v392
        %v425 = vmul.f32 %v359, %v393
        %v426 = vmul.f32 %v361, %v394
        %v427 = vmul.f32 %v363, %v395
        %v428 = vsel %vm396, %v380, %v412
        %v429 = vsel %vm397, %v381, %v413
        %v430 = vsel %vm398, %v382, %v414
        %v431 = vsel %vm399, %v383, %v415
        %v432 = vsel %vm400, %v384, %v416
        %v433 = vsel %vm401, %v385, %v417
        %v434 = vsel %vm402, %v386, %v418
        %v435 = vsel %vm403, %v387, %v419
        %v436 = vsel %vm404, %v388, %v420
        %v437 = vsel %vm405, %v389, %v421
        %v438 = vsel %vm406, %v390, %v422
        %v439 = vsel %vm407, %v391, %v423
        %v440 = vsel %vm408, %v392, %v424
        %v441 = vsel %vm409, %v393, %v425
        %v442 = vsel %vm410, %v394, %v426
        %v443 = vsel %vm411, %v395, %v427
        %v444 = vmax.f32 %v263, 0.0
        %v445 = vmax.f32 %v264, 0.0
        %v446 = vmax.f32 %v265, 0.0
        %v447 = vmax.f32 %v266, 0.0
        %v448 = vmax.f32 %v267, 0.0
        %v449 = vmax.f32 %v268, 0.0
        %v450 = vmax.f32 %v269, 0.0
        %v451 = vmax.f32 %v270, 0.0
        %v452 = vmax.f32 %v271, 0.0
        %v453 = vmax.f32 %v272, 0.0
        %v454 = vmax.f32 %v273, 0.0
        %v455 = vmax.f32 %v274, 0.0
        %v456 = vmax.f32 %v275, 0.0
        %v457 = vmax.f32 %v276, 0.0
        %v458 = vmax.f32 %v277, 0.0
        %v459 = vmax.f32 %v278, 0.0
        %v460 = vlog2.pop %v364
        %v461 = vmul.f32 %v460, 0.6931472
        %v462 = vlog2.pop %v365
        %v463 = vmul.f32 %v462, 0.6931472
        %v464 = vlog2.pop %v366
        %v465 = vmul.f32 %v464, 0.6931472
        %v466 = vlog2.pop %v367
        %v467 = vmul.f32 %v466, 0.6931472
        %v468 = vlog2.pop %v368
        %v469 = vmul.f32 %v468, 0.6931472
        %v470 = vlog2.pop %v369
        %v471 = vmul.f32 %v470, 0.6931472
        %v472 = vlog2.pop %v370
        %v473 = vmul.f32 %v472, 0.6931472
        %v474 = vlog2.pop %v371
        %v475 = vmul.f32 %v474, 0.6931472
        %v476 = vlog2.pop %v372
        %v477 = vmul.f32 %v476, 0.6931472
        %v478 = vlog2.pop %v373
        %v479 = vmul.f32 %v478, 0.6931472
        %v480 = vlog2.pop %v374
        %v481 = vmul.f32 %v480, 0.6931472
        %v482 = vlog2.pop %v375
        %v483 = vmul.f32 %v482, 0.6931472
        %v484 = vlog2.pop %v376
        %v485 = vmul.f32 %v484, 0.6931472
        %v486 = vlog2.pop %v377
        %v487 = vmul.f32 %v486, 0.6931472
        %v488 = vlog2.pop %v378
        %v489 = vmul.f32 %v488, 0.6931472
        %v490 = vlog2.pop %v379
        %v491 = vmul.f32 %v490, 0.6931472
        %v492 = vadd.f32 %v444, %v461
        %v493 = vadd.f32 %v445, %v463
        %v494 = vadd.f32 %v446, %v465
        %v495 = vadd.f32 %v447, %v467
        %v496 = vadd.f32 %v448, %v469
        %v497 = vadd.f32 %v449, %v471
        %v498 = vadd.f32 %v450, %v473
        %v499 = vadd.f32 %v451, %v475
        %v500 = vadd.f32 %v452, %v477
        %v501 = vadd.f32 %v453, %v479
        %v502 = vadd.f32 %v454, %v481
        %v503 = vadd.f32 %v455, %v483
        %v504 = vadd.f32 %v456, %v485
        %v505 = vadd.f32 %v457, %v487
        %v506 = vadd.f32 %v458, %v489
        %v507 = vadd.f32 %v459, %v491
        %v508 = vmul.f32 %v428, %v428
        %v509 = vmul.f32 %v429, %v429
        %v510 = vmul.f32 %v430, %v430
        %v511 = vmul.f32 %v431, %v431
        %v512 = vmul.f32 %v432, %v432
        %v513 = vmul.f32 %v433, %v433
        %v514 = vmul.f32 %v434, %v434
        %v515 = vmul.f32 %v435, %v435
        %v516 = vmul.f32 %v436, %v436
        %v517 = vmul.f32 %v437, %v437
        %v518 = vmul.f32 %v438, %v438
        %v519 = vmul.f32 %v439, %v439
        %v520 = vmul.f32 %v440, %v440
        %v521 = vmul.f32 %v441, %v441
        %v522 = vmul.f32 %v442, %v442
        %v523 = vmul.f32 %v443, %v443
        %v524 = vmul.f32 %v492, %v508
        %v525 = vmul.f32 %v493, %v509
        %v526 = vmul.f32 %v494, %v510
        %v527 = vmul.f32 %v495, %v511
        %v528 = vmul.f32 %v496, %v512
        %v529 = vmul.f32 %v497, %v513
        %v530 = vmul.f32 %v498, %v514
        %v531 = vmul.f32 %v499, %v515
        %v532 = vmul.f32 %v500, %v516
        %v533 = vmul.f32 %v501, %v517
        %v534 = vmul.f32 %v502, %v518
        %v535 = vmul.f32 %v503, %v519
        %v536 = vmul.f32 %v504, %v520
        %v537 = vmul.f32 %v505, %v521
        %v538 = vmul.f32 %v506, %v522
        %v539 = vmul.f32 %v507, %v523
        %v542 = vlaneseq
        %v543 = vshrl.u32 %v542, 7
        %v544 = vsub.s32 0, %v543
        %v545 = vrot.slane %v283, %v544
        %v546 = vlaneseq
        %v547 = vshrl.u32 %v546, 7
        %v548 = vsub.s32 1, %v547
        %v549 = vrot.slane %v283, %v548
        %v550 = vlaneseq
        %v551 = vshrl.u32 %v550, 7
        %v552 = vsub.s32 2, %v551
        %v553 = vrot.slane %v283, %v552
        %v554 = vlaneseq
        %v555 = vshrl.u32 %v554, 7
        %v556 = vsub.s32 3, %v555
        %v557 = vrot.slane %v283, %v556
        %v558 = vlaneseq
        %v559 = vshrl.u32 %v558, 7
        %v560 = vsub.s32 4, %v559
        %v561 = vrot.slane %v283, %v560
        %v562 = vlaneseq
        %v563 = vshrl.u32 %v562, 7
        %v564 = vsub.s32 5, %v563
        %v565 = vrot.slane %v283, %v564
        %v566 = vlaneseq
        %v567 = vshrl.u32 %v566, 7
        %v568 = vsub.s32 6, %v567
        %v569 = vrot.slane %v283, %v568
        %v570 = vlaneseq
        %v571 = vshrl.u32 %v570, 7
        %v572 = vsub.s32 7, %v571
        %v573 = vrot.slane %v283, %v572
        %v574 = vlaneseq
        %v575 = vshrl.u32 %v574, 7
        %v576 = vsub.s32 0, %v575
        %v577 = vrot.slane %v285, %v576
        %v578 = vlaneseq
        %v579 = vshrl.u32 %v578, 7
        %v580 = vsub.s32 1, %v579
        %v581 = vrot.slane %v285, %v580
        %v582 = vlaneseq
        %v583 = vshrl.u32 %v582, 7
        %v584 = vsub.s32 2, %v583
        %v585 = vrot.slane %v285, %v584
        %v586 = vlaneseq
        %v587 = vshrl.u32 %v586, 7
        %v588 = vsub.s32 3, %v587
        %v589 = vrot.slane %v285, %v588
        %v590 = vlaneseq
        %v591 = vshrl.u32 %v590, 7
        %v592 = vsub.s32 4, %v591
        %v593 = vrot.slane %v285, %v592
        %v594 = vlaneseq
        %v595 = vshrl.u32 %v594, 7
        %v596 = vsub.s32 5, %v595
        %v597 = vrot.slane %v285, %v596
        %v598 = vlaneseq
        %v599 = vshrl.u32 %v598, 7
        %v600 = vsub.s32 6, %v599
        %v601 = vrot.slane %v285, %v600
        %v602 = vlaneseq
        %v603 = vshrl.u32 %v602, 7
        %v604 = vsub.s32 7, %v603
        %v605 = vrot.slane %v285, %v604
        %v622 = vmul.f32 %v263, %v545
        %v623 = vmul.f32 %v264, %v549
        %v624 = vmul.f32 %v265, %v553
        %v625 = vmul.f32 %v266, %v557
        %v626 = vmul.f32 %v267, %v561
        %v627 = vmul.f32 %v268, %v565
        %v628 = vmul.f32 %v269, %v569
        %v629 = vmul.f32 %v270, %v573
        %v630 = vmul.f32 %v271, %v577
        %v631 = vmul.f32 %v272, %v581
        %v632 = vmul.f32 %v273, %v585
        %v633 = vmul.f32 %v274, %v589
        %v634 = vmul.f32 %v275, %v593
        %v635 = vmul.f32 %v276, %v597
        %v636 = vmul.f32 %v277, %v601
        %v637 = vmul.f32 %v278, %v605
        %v638 = vsub.f32 %v492, %v622
        %v639 = vsub.f32 %v493, %v623
        %v640 = vsub.f32 %v494, %v624
        %v641 = vsub.f32 %v495, %v625
        %v642 = vsub.f32 %v496, %v626
        %v643 = vsub.f32 %v497, %v627
        %v644 = vsub.f32 %v498, %v628
        %v645 = vsub.f32 %v499, %v629
        %v646 = vsub.f32 %v500, %v630
        %v647 = vsub.f32 %v501, %v631
        %v648 = vsub.f32 %v502, %v632
        %v649 = vsub.f32 %v503, %v633
        %v650 = vsub.f32 %v504, %v634
        %v651 = vsub.f32 %v505, %v635
        %v652 = vsub.f32 %v506, %v636
        %v653 = vsub.f32 %v507, %v637
        %v654 = vsub.f32 %v545, %v428
        %v655 = vsub.f32 %v549, %v429
        %v656 = vsub.f32 %v553, %v430
        %v657 = vsub.f32 %v557, %v431
        %v658 = vsub.f32 %v561, %v432
        %v659 = vsub.f32 %v565, %v433
        %v660 = vsub.f32 %v569, %v434
        %v661 = vsub.f32 %v573, %v435
        %v662 = vsub.f32 %v577, %v436
        %v663 = vsub.f32 %v581, %v437
        %v664 = vsub.f32 %v585, %v438
        %v665 = vsub.f32 %v589, %v439
        %v666 = vsub.f32 %v593, %v440
        %v667 = vsub.f32 %v597, %v441
        %v668 = vsub.f32 %v601, %v442
        %v669 = vsub.f32 %v605, %v443
        %v670 = vmul.f32 %v654, %v654
        %v671 = vmul.f32 %v655, %v655
        %v672 = vmul.f32 %v656, %v656
        %v673 = vmul.f32 %v657, %v657
        %v674 = vmul.f32 %v658, %v658
        %v675 = vmul.f32 %v659, %v659
        %v676 = vmul.f32 %v660, %v660
        %v677 = vmul.f32 %v661, %v661
        %v678 = vmul.f32 %v662, %v662
        %v679 = vmul.f32 %v663, %v663
        %v680 = vmul.f32 %v664, %v664
        %v681 = vmul.f32 %v665, %v665
        %v682 = vmul.f32 %v666, %v666
        %v683 = vmul.f32 %v667, %v667
        %v684 = vmul.f32 %v668, %v668
        %v685 = vmul.f32 %v669, %v669
        %v686 = vmul.f32 %v638, %v670
        %v687 = vmul.f32 %v639, %v671
        %v688 = vmul.f32 %v640, %v672
        %v689 = vmul.f32 %v641, %v673
        %v690 = vmul.f32 %v642, %v674
        %v691 = vmul.f32 %v643, %v675
        %v692 = vmul.f32 %v644, %v676
        %v693 = vmul.f32 %v645, %v677
        %v694 = vmul.f32 %v646, %v678
        %v695 = vmul.f32 %v647, %v679
        %v696 = vmul.f32 %v648, %v680
        %v697 = vmul.f32 %v649, %v681
        %v698 = vmul.f32 %v650, %v682
        %v699 = vmul.f32 %v651, %v683
        %v700 = vmul.f32 %v652, %v684
        %v701 = vmul.f32 %v653, %v685
        %v702 = vlaneseq
        %v703 = vshrl.u32 %v702, 7
        %v704 = vlaneseq
        %v705 = vshrl.u32 %v704, 7
        %v706 = vsub.s32 0, %v705
        %v707 = vrot.slane %v290, %v706
        %v708 = vlaneseq
        %v709 = vshrl.u32 %v708, 7
        %v710 = vsub.s32 1, %v709
        %v711 = vrot.slane %v290, %v710
        %v712 = vlaneseq
        %v713 = vshrl.u32 %v712, 7
        %v714 = vsub.s32 2, %v713
        %v715 = vrot.slane %v290, %v714
        %v716 = vlaneseq
        %v717 = vshrl.u32 %v716, 7
        %v718 = vsub.s32 3, %v717
        %v719 = vrot.slane %v290, %v718
        %v720 = vlaneseq
        %v721 = vshrl.u32 %v720, 7
        %v722 = vsub.s32 4, %v721
        %v723 = vrot.slane %v290, %v722
        %v724 = vlaneseq
        %v725 = vshrl.u32 %v724, 7
        %v726 = vsub.s32 5, %v725
        %v727 = vrot.slane %v290, %v726
        %v728 = vlaneseq
        %v729 = vshrl.u32 %v728, 7
        %v730 = vsub.s32 6, %v729
        %v731 = vrot.slane %v290, %v730
        %v732 = vlaneseq
        %v733 = vshrl.u32 %v732, 7
        %v734 = vsub.s32 7, %v733
        %v735 = vrot.slane %v290, %v734
        %v736 = vlaneseq
        %v737 = vshrl.u32 %v736, 7
        %v738 = vsub.s32 0, %v737
        %v739 = vrot.slane %v291, %v738
        %v740 = vlaneseq
        %v741 = vshrl.u32 %v740, 7
        %v742 = vsub.s32 1, %v741
        %v743 = vrot.slane %v291, %v742
        %v744 = vlaneseq
        %v745 = vshrl.u32 %v744, 7
        %v746 = vsub.s32 2, %v745
        %v747 = vrot.slane %v291, %v746
        %v748 = vlaneseq
        %v749 = vshrl.u32 %v748, 7
        %v750 = vsub.s32 3, %v749
        %v751 = vrot.slane %v291, %v750
        %v752 = vlaneseq
        %v753 = vshrl.u32 %v752, 7
        %v754 = vsub.s32 4, %v753
        %v755 = vrot.slane %v291, %v754
        %v756 = vlaneseq
        %v757 = vshrl.u32 %v756, 7
        %v758 = vsub.s32 5, %v757
        %v759 = vrot.slane %v291, %v758
        %v760 = vlaneseq
        %v761 = vshrl.u32 %v760, 7
        %v762 = vsub.s32 6, %v761
        %v763 = vrot.slane %v291, %v762
        %v764 = vlaneseq
        %v765 = vshrl.u32 %v764, 7
        %v766 = vsub.s32 7, %v765
        %v767 = vrot.slane %v291, %v766
        %vm768 = vcmp.eq.s32.totalorder %v703, %v707
        %vm769 = vcmp.eq.s32.totalorder %v703, %v711
        %vm770 = vcmp.eq.s32.totalorder %v703, %v715
        %vm771 = vcmp.eq.s32.totalorder %v703, %v719
        %vm772 = vcmp.eq.s32.totalorder %v703, %v723
        %vm773 = vcmp.eq.s32.totalorder %v703, %v727
        %vm774 = vcmp.eq.s32.totalorder %v703, %v731
        %vm775 = vcmp.eq.s32.totalorder %v703, %v735
        %vm776 = vcmp.eq.s32.totalorder %v703, %v739
        %vm777 = vcmp.eq.s32.totalorder %v703, %v743
        %vm778 = vcmp.eq.s32.totalorder %v703, %v747
        %vm779 = vcmp.eq.s32.totalorder %v703, %v751
        %vm780 = vcmp.eq.s32.totalorder %v703, %v755
        %vm781 = vcmp.eq.s32.totalorder %v703, %v759
        %vm782 = vcmp.eq.s32.totalorder %v703, %v763
        %vm783 = vcmp.eq.s32.totalorder %v703, %v767
        %v784 = vsel %vm296, 1, 0
        %v785 = vsel %vm297, 1, 0
        %v786 = vlaneseq
        %v787 = vshrl.u32 %v786, 7
        %v788 = vsub.s32 0, %v787
        %v789 = vrot.slane %v784, %v788
        %v790 = vlaneseq
        %v791 = vshrl.u32 %v790, 7
        %v792 = vsub.s32 1, %v791
        %v793 = vrot.slane %v784, %v792
        %v794 = vlaneseq
        %v795 = vshrl.u32 %v794, 7
        %v796 = vsub.s32 2, %v795
        %v797 = vrot.slane %v784, %v796
        %v798 = vlaneseq
        %v799 = vshrl.u32 %v798, 7
        %v800 = vsub.s32 3, %v799
        %v801 = vrot.slane %v784, %v800
        %v802 = vlaneseq
        %v803 = vshrl.u32 %v802, 7
        %v804 = vsub.s32 4, %v803
        %v805 = vrot.slane %v784, %v804
        %v806 = vlaneseq
        %v807 = vshrl.u32 %v806, 7
        %v808 = vsub.s32 5, %v807
        %v809 = vrot.slane %v784, %v808
        %v810 = vlaneseq
        %v811 = vshrl.u32 %v810, 7
        %v812 = vsub.s32 6, %v811
        %v813 = vrot.slane %v784, %v812
        %v814 = vlaneseq
        %v815 = vshrl.u32 %v814, 7
        %v816 = vsub.s32 7, %v815
        %v817 = vrot.slane %v784, %v816
        %v818 = vlaneseq
        %v819 = vshrl.u32 %v818, 7
        %v820 = vsub.s32 0, %v819
        %v821 = vrot.slane %v785, %v820
        %v822 = vlaneseq
        %v823 = vshrl.u32 %v822, 7
        %v824 = vsub.s32 1, %v823
        %v825 = vrot.slane %v785, %v824
        %v826 = vlaneseq
        %v827 = vshrl.u32 %v826, 7
        %v828 = vsub.s32 2, %v827
        %v829 = vrot.slane %v785, %v828
        %v830 = vlaneseq
        %v831 = vshrl.u32 %v830, 7
        %v832 = vsub.s32 3, %v831
        %v833 = vrot.slane %v785, %v832
        %v834 = vlaneseq
        %v835 = vshrl.u32 %v834, 7
        %v836 = vsub.s32 4, %v835
        %v837 = vrot.slane %v785, %v836
        %v838 = vlaneseq
        %v839 = vshrl.u32 %v838, 7
        %v840 = vsub.s32 5, %v839
        %v841 = vrot.slane %v785, %v840
        %v842 = vlaneseq
        %v843 = vshrl.u32 %v842, 7
        %v844 = vsub.s32 6, %v843
        %v845 = vrot.slane %v785, %v844
        %v846 = vlaneseq
        %v847 = vshrl.u32 %v846, 7
        %v848 = vsub.s32 7, %v847
        %v849 = vrot.slane %v785, %v848
        %vm850 = vcmp.eq.s32.totalorder %v789, 1
        %vm851 = vcmp.eq.s32.totalorder %v793, 1
        %vm852 = vcmp.eq.s32.totalorder %v797, 1
        %vm853 = vcmp.eq.s32.totalorder %v801, 1
        %vm854 = vcmp.eq.s32.totalorder %v805, 1
        %vm855 = vcmp.eq.s32.totalorder %v809, 1
        %vm856 = vcmp.eq.s32.totalorder %v813, 1
        %vm857 = vcmp.eq.s32.totalorder %v817, 1
        %vm858 = vcmp.eq.s32.totalorder %v821, 1
        %vm859 = vcmp.eq.s32.totalorder %v825, 1
        %vm860 = vcmp.eq.s32.totalorder %v829, 1
        %vm861 = vcmp.eq.s32.totalorder %v833, 1
        %vm862 = vcmp.eq.s32.totalorder %v837, 1
        %vm863 = vcmp.eq.s32.totalorder %v841, 1
        %vm864 = vcmp.eq.s32.totalorder %v845, 1
        %vm865 = vcmp.eq.s32.totalorder %v849, 1
        %vm866 = vmand %vm768, %vm850
        %vm867 = vmand %vm769, %vm851
        %vm868 = vmand %vm770, %vm852
        %vm869 = vmand %vm771, %vm853
        %vm870 = vmand %vm772, %vm854
        %vm871 = vmand %vm773, %vm855
        %vm872 = vmand %vm774, %vm856
        %vm873 = vmand %vm775, %vm857
        %vm874 = vmand %vm776, %vm858
        %vm875 = vmand %vm777, %vm859
        %vm876 = vmand %vm778, %vm860
        %vm877 = vmand %vm779, %vm861
        %vm878 = vmand %vm780, %vm862
        %vm879 = vmand %vm781, %vm863
        %vm880 = vmand %vm782, %vm864
        %vm881 = vmand %vm783, %vm865
        %v882 = vsel %vm866, %v686, %v524
        %v883 = vsel %vm867, %v687, %v525
        %v884 = vsel %vm868, %v688, %v526
        %v885 = vsel %vm869, %v689, %v527
        %v886 = vsel %vm870, %v690, %v528
        %v887 = vsel %vm871, %v691, %v529
        %v888 = vsel %vm872, %v692, %v530
        %v889 = vsel %vm873, %v693, %v531
        %v890 = vsel %vm874, %v694, %v532
        %v891 = vsel %vm875, %v695, %v533
        %v892 = vsel %vm876, %v696, %v534
        %v893 = vsel %vm877, %v697, %v535
        %v894 = vsel %vm878, %v698, %v536
        %v895 = vsel %vm879, %v699, %v537
        %v896 = vsel %vm880, %v700, %v538
        %v897 = vsel %vm881, %v701, %v539
        %v900 = vlaneseq
        %v901 = vshrl.u32 %v900, 7
        %v902 = vsub.s32 0, %v901
        %v903 = vrot.slane %v298, %v902
        %v904 = vlaneseq
        %v905 = vshrl.u32 %v904, 7
        %v906 = vsub.s32 1, %v905
        %v907 = vrot.slane %v298, %v906
        %v908 = vlaneseq
        %v909 = vshrl.u32 %v908, 7
        %v910 = vsub.s32 2, %v909
        %v911 = vrot.slane %v298, %v910
        %v912 = vlaneseq
        %v913 = vshrl.u32 %v912, 7
        %v914 = vsub.s32 3, %v913
        %v915 = vrot.slane %v298, %v914
        %v916 = vlaneseq
        %v917 = vshrl.u32 %v916, 7
        %v918 = vsub.s32 4, %v917
        %v919 = vrot.slane %v298, %v918
        %v920 = vlaneseq
        %v921 = vshrl.u32 %v920, 7
        %v922 = vsub.s32 5, %v921
        %v923 = vrot.slane %v298, %v922
        %v924 = vlaneseq
        %v925 = vshrl.u32 %v924, 7
        %v926 = vsub.s32 6, %v925
        %v927 = vrot.slane %v298, %v926
        %v928 = vlaneseq
        %v929 = vshrl.u32 %v928, 7
        %v930 = vsub.s32 7, %v929
        %v931 = vrot.slane %v298, %v930
        %v932 = vlaneseq
        %v933 = vshrl.u32 %v932, 7
        %v934 = vsub.s32 0, %v933
        %v935 = vrot.slane %v299, %v934
        %v936 = vlaneseq
        %v937 = vshrl.u32 %v936, 7
        %v938 = vsub.s32 1, %v937
        %v939 = vrot.slane %v299, %v938
        %v940 = vlaneseq
        %v941 = vshrl.u32 %v940, 7
        %v942 = vsub.s32 2, %v941
        %v943 = vrot.slane %v299, %v942
        %v944 = vlaneseq
        %v945 = vshrl.u32 %v944, 7
        %v946 = vsub.s32 3, %v945
        %v947 = vrot.slane %v299, %v946
        %v948 = vlaneseq
        %v949 = vshrl.u32 %v948, 7
        %v950 = vsub.s32 4, %v949
        %v951 = vrot.slane %v299, %v950
        %v952 = vlaneseq
        %v953 = vshrl.u32 %v952, 7
        %v954 = vsub.s32 5, %v953
        %v955 = vrot.slane %v299, %v954
        %v956 = vlaneseq
        %v957 = vshrl.u32 %v956, 7
        %v958 = vsub.s32 6, %v957
        %v959 = vrot.slane %v299, %v958
        %v960 = vlaneseq
        %v961 = vshrl.u32 %v960, 7
        %v962 = vsub.s32 7, %v961
        %v963 = vrot.slane %v299, %v962
        %v980 = vmul.f32 %v882, %v903
        %v981 = vmul.f32 %v883, %v907
        %v982 = vmul.f32 %v884, %v911
        %v983 = vmul.f32 %v885, %v915
        %v984 = vmul.f32 %v886, %v919
        %v985 = vmul.f32 %v887, %v923
        %v986 = vmul.f32 %v888, %v927
        %v987 = vmul.f32 %v889, %v931
        %v988 = vmul.f32 %v890, %v935
        %v989 = vmul.f32 %v891, %v939
        %v990 = vmul.f32 %v892, %v943
        %v991 = vmul.f32 %v893, %v947
        %v992 = vmul.f32 %v894, %v951
        %v993 = vmul.f32 %v895, %v955
        %v994 = vmul.f32 %v896, %v959
        %v995 = vmul.f32 %v897, %v963
        %v996 = vadd.f32 %v980, %v981
        %v997 = vadd.f32 %v996, %v982
        %v998 = vadd.f32 %v997, %v983
        %v999 = vadd.f32 %v998, %v984
        %v1000 = vadd.f32 %v999, %v985
        %v1001 = vadd.f32 %v1000, %v986
        %v1002 = vadd.f32 %v1001, %v987
        %v1003 = vadd.f32 %v1002, %v988
        %v1004 = vadd.f32 %v1003, %v989
        %v1005 = vadd.f32 %v1004, %v990
        %v1006 = vadd.f32 %v1005, %v991
        %v1007 = vadd.f32 %v1006, %v992
        %v1008 = vadd.f32 %v1007, %v993
        %v1009 = vadd.f32 %v1008, %v994
        %v1010 = vadd.f32 %v1009, %v995
        %1011 = vadd.xlane.f32.xlu0 %v1010
        %v1012 = vpop.xlane.xlu0 %1011
        %v1013 = vrot.slane %v1012, 4
        %v1014 = vadd.f32 %v1012, %v1013
        %v1015 = vrot.slane %v1014, 2
        %v1016 = vadd.f32 %v1014, %v1015
        %v1017 = vrot.slane %v1016, 1
        %v1018 = vadd.f32 %v1016, %v1017
        %s1019 = vtos %v1018
        %v1020 = vld [vmem:[%s218] sm:$0xf]
        %v1021 = vld [vmem:[%s218 + $0x8] sm:$0xf]
        %v1022 = vld [vmem:[%s218 + $0x10] sm:$0xf]
        %v1023 = vld [vmem:[%s218 + $0x18] sm:$0xf]
        %v1024 = vld [vmem:[%s218 + $0x20] sm:$0xf]
        %v1025 = vld [vmem:[%s218 + $0x28] sm:$0xf]
        %v1026 = vld [vmem:[%s218 + $0x30] sm:$0xf]
        %v1027 = vld [vmem:[%s218 + $0x38] sm:$0xf]
        %v1028 = vld [vmem:[%s218 + $0x40] sm:$0xf]
        %v1029 = vld [vmem:[%s218 + $0x48] sm:$0xf]
        %v1030 = vld [vmem:[%s218 + $0x50] sm:$0xf]
        %v1031 = vld [vmem:[%s218 + $0x58] sm:$0xf]
        %v1032 = vld [vmem:[%s218 + $0x60] sm:$0xf]
        %v1033 = vld [vmem:[%s218 + $0x68] sm:$0xf]
        %v1034 = vld [vmem:[%s218 + $0x70] sm:$0xf]
        %v1035 = vld [vmem:[%s218 + $0x78] sm:$0xf]
        %v1036 = vld [vmem:[%s218] sm:$0xf0]
        %v1037 = vld [vmem:[%s218 + $0x8] sm:$0xf0]
        %v1038 = vld [vmem:[%s218 + $0x10] sm:$0xf0]
        %v1039 = vld [vmem:[%s218 + $0x18] sm:$0xf0]
        %v1040 = vld [vmem:[%s218 + $0x20] sm:$0xf0]
        %v1041 = vld [vmem:[%s218 + $0x28] sm:$0xf0]
        %v1042 = vld [vmem:[%s218 + $0x30] sm:$0xf0]
        %v1043 = vld [vmem:[%s218 + $0x38] sm:$0xf0]
        %v1044 = vld [vmem:[%s218 + $0x40] sm:$0xf0]
        %v1045 = vld [vmem:[%s218 + $0x48] sm:$0xf0]
        %v1046 = vld [vmem:[%s218 + $0x50] sm:$0xf0]
        %v1047 = vld [vmem:[%s218 + $0x58] sm:$0xf0]
        %v1048 = vld [vmem:[%s218 + $0x60] sm:$0xf0]
        %v1049 = vld [vmem:[%s218 + $0x68] sm:$0xf0]
        %v1050 = vld [vmem:[%s218 + $0x70] sm:$0xf0]
        %v1051 = vld [vmem:[%s218 + $0x78] sm:$0xf0]
        %vm1052 = vcmp.lt.s32.totalorder %v703, 2
        %v1069 = vrot.slane %v1036, 4
        %v1070 = vrot.slane %v1037, 4
        %v1071 = vrot.slane %v1038, 4
        %v1072 = vrot.slane %v1039, 4
        %v1073 = vrot.slane %v1040, 4
        %v1074 = vrot.slane %v1041, 4
        %v1075 = vrot.slane %v1042, 4
        %v1076 = vrot.slane %v1043, 4
        %v1077 = vrot.slane %v1044, 4
        %v1078 = vrot.slane %v1045, 4
        %v1079 = vrot.slane %v1046, 4
        %v1080 = vrot.slane %v1047, 4
        %v1081 = vrot.slane %v1048, 4
        %v1082 = vrot.slane %v1049, 4
        %v1083 = vrot.slane %v1050, 4
        %v1084 = vrot.slane %v1051, 4
        %v1101 = vmax.f32 %v1020, %v1069
        %v1102 = vmax.f32 %v1021, %v1070
        %v1103 = vmax.f32 %v1022, %v1071
        %v1104 = vmax.f32 %v1023, %v1072
        %v1105 = vmax.f32 %v1024, %v1073
        %v1106 = vmax.f32 %v1025, %v1074
        %v1107 = vmax.f32 %v1026, %v1075
        %v1108 = vmax.f32 %v1027, %v1076
        %v1109 = vmax.f32 %v1028, %v1077
        %v1110 = vmax.f32 %v1029, %v1078
        %v1111 = vmax.f32 %v1030, %v1079
        %v1112 = vmax.f32 %v1031, %v1080
        %v1113 = vmax.f32 %v1032, %v1081
        %v1114 = vmax.f32 %v1033, %v1082
        %v1115 = vmax.f32 %v1034, %v1083
        %v1116 = vmax.f32 %v1035, %v1084
        %v1117 = vmin.f32 %v1020, %v1069
        %v1118 = vmin.f32 %v1021, %v1070
        %v1119 = vmin.f32 %v1022, %v1071
        %v1120 = vmin.f32 %v1023, %v1072
        %v1121 = vmin.f32 %v1024, %v1073
        %v1122 = vmin.f32 %v1025, %v1074
        %v1123 = vmin.f32 %v1026, %v1075
        %v1124 = vmin.f32 %v1027, %v1076
        %v1125 = vmin.f32 %v1028, %v1077
        %v1126 = vmin.f32 %v1029, %v1078
        %v1127 = vmin.f32 %v1030, %v1079
        %v1128 = vmin.f32 %v1031, %v1080
        %v1129 = vmin.f32 %v1032, %v1081
        %v1130 = vmin.f32 %v1033, %v1082
        %v1131 = vmin.f32 %v1034, %v1083
        %v1132 = vmin.f32 %v1035, %v1084
        %v1133 = vsel %vm1052, %v1101, %v1117
        %v1134 = vsel %vm1052, %v1102, %v1118
        %v1135 = vsel %vm1052, %v1103, %v1119
        %v1136 = vsel %vm1052, %v1104, %v1120
        %v1137 = vsel %vm1052, %v1105, %v1121
        %v1138 = vsel %vm1052, %v1106, %v1122
        %v1139 = vsel %vm1052, %v1107, %v1123
        %v1140 = vsel %vm1052, %v1108, %v1124
        %v1141 = vsel %vm1052, %v1109, %v1125
        %v1142 = vsel %vm1052, %v1110, %v1126
        %v1143 = vsel %vm1052, %v1111, %v1127
        %v1144 = vsel %vm1052, %v1112, %v1128
        %v1145 = vsel %vm1052, %v1113, %v1129
        %v1146 = vsel %vm1052, %v1114, %v1130
        %v1147 = vsel %vm1052, %v1115, %v1131
        %v1148 = vsel %vm1052, %v1116, %v1132
        %v1149 = vsel %vm1052, %v1117, %v1101
        %v1150 = vsel %vm1052, %v1118, %v1102
        %v1151 = vsel %vm1052, %v1119, %v1103
        %v1152 = vsel %vm1052, %v1120, %v1104
        %v1153 = vsel %vm1052, %v1121, %v1105
        %v1154 = vsel %vm1052, %v1122, %v1106
        %v1155 = vsel %vm1052, %v1123, %v1107
        %v1156 = vsel %vm1052, %v1124, %v1108
        %v1157 = vsel %vm1052, %v1125, %v1109
        %v1158 = vsel %vm1052, %v1126, %v1110
        %v1159 = vsel %vm1052, %v1127, %v1111
        %v1160 = vsel %vm1052, %v1128, %v1112
        %v1161 = vsel %vm1052, %v1129, %v1113
        %v1162 = vsel %vm1052, %v1130, %v1114
        %v1163 = vsel %vm1052, %v1131, %v1115
        %v1164 = vsel %vm1052, %v1132, %v1116
        %v1181 = vrot.slane %v1020, 6
        %v1182 = vrot.slane %v1021, 6
        %v1183 = vrot.slane %v1022, 6
        %v1184 = vrot.slane %v1023, 6
        %v1185 = vrot.slane %v1024, 6
        %v1186 = vrot.slane %v1025, 6
        %v1187 = vrot.slane %v1026, 6
        %v1188 = vrot.slane %v1027, 6
        %v1189 = vrot.slane %v1028, 6
        %v1190 = vrot.slane %v1029, 6
        %v1191 = vrot.slane %v1030, 6
        %v1192 = vrot.slane %v1031, 6
        %v1193 = vrot.slane %v1032, 6
        %v1194 = vrot.slane %v1033, 6
        %v1195 = vrot.slane %v1034, 6
        %v1196 = vrot.slane %v1035, 6
        %v1213 = vsub.f32 %v1020, %v1181
        %v1214 = vsub.f32 %v1021, %v1182
        %v1215 = vsub.f32 %v1022, %v1183
        %v1216 = vsub.f32 %v1023, %v1184
        %v1217 = vsub.f32 %v1024, %v1185
        %v1218 = vsub.f32 %v1025, %v1186
        %v1219 = vsub.f32 %v1026, %v1187
        %v1220 = vsub.f32 %v1027, %v1188
        %v1221 = vsub.f32 %v1028, %v1189
        %v1222 = vsub.f32 %v1029, %v1190
        %v1223 = vsub.f32 %v1030, %v1191
        %v1224 = vsub.f32 %v1031, %v1192
        %v1225 = vsub.f32 %v1032, %v1193
        %v1226 = vsub.f32 %v1033, %v1194
        %v1227 = vsub.f32 %v1034, %v1195
        %v1228 = vsub.f32 %v1035, %v1196
        %v1229 = vrot.slane %v1036, 6
        %v1230 = vrot.slane %v1037, 6
        %v1231 = vrot.slane %v1038, 6
        %v1232 = vrot.slane %v1039, 6
        %v1233 = vrot.slane %v1040, 6
        %v1234 = vrot.slane %v1041, 6
        %v1235 = vrot.slane %v1042, 6
        %v1236 = vrot.slane %v1043, 6
        %v1237 = vrot.slane %v1044, 6
        %v1238 = vrot.slane %v1045, 6
        %v1239 = vrot.slane %v1046, 6
        %v1240 = vrot.slane %v1047, 6
        %v1241 = vrot.slane %v1048, 6
        %v1242 = vrot.slane %v1049, 6
        %v1243 = vrot.slane %v1050, 6
        %v1244 = vrot.slane %v1051, 6
        %v1261 = vsub.f32 %v1036, %v1229
        %v1262 = vsub.f32 %v1037, %v1230
        %v1263 = vsub.f32 %v1038, %v1231
        %v1264 = vsub.f32 %v1039, %v1232
        %v1265 = vsub.f32 %v1040, %v1233
        %v1266 = vsub.f32 %v1041, %v1234
        %v1267 = vsub.f32 %v1042, %v1235
        %v1268 = vsub.f32 %v1043, %v1236
        %v1269 = vsub.f32 %v1044, %v1237
        %v1270 = vsub.f32 %v1045, %v1238
        %v1271 = vsub.f32 %v1046, %v1239
        %v1272 = vsub.f32 %v1047, %v1240
        %v1273 = vsub.f32 %v1048, %v1241
        %v1274 = vsub.f32 %v1049, %v1242
        %v1275 = vsub.f32 %v1050, %v1243
        %v1276 = vsub.f32 %v1051, %v1244
        %v1293 = vrot.slane %v1133, 6
        %v1294 = vrot.slane %v1134, 6
        %v1295 = vrot.slane %v1135, 6
        %v1296 = vrot.slane %v1136, 6
        %v1297 = vrot.slane %v1137, 6
        %v1298 = vrot.slane %v1138, 6
        %v1299 = vrot.slane %v1139, 6
        %v1300 = vrot.slane %v1140, 6
        %v1301 = vrot.slane %v1141, 6
        %v1302 = vrot.slane %v1142, 6
        %v1303 = vrot.slane %v1143, 6
        %v1304 = vrot.slane %v1144, 6
        %v1305 = vrot.slane %v1145, 6
        %v1306 = vrot.slane %v1146, 6
        %v1307 = vrot.slane %v1147, 6
        %v1308 = vrot.slane %v1148, 6
        %v1325 = vsub.f32 %v1133, %v1293
        %v1326 = vsub.f32 %v1134, %v1294
        %v1327 = vsub.f32 %v1135, %v1295
        %v1328 = vsub.f32 %v1136, %v1296
        %v1329 = vsub.f32 %v1137, %v1297
        %v1330 = vsub.f32 %v1138, %v1298
        %v1331 = vsub.f32 %v1139, %v1299
        %v1332 = vsub.f32 %v1140, %v1300
        %v1333 = vsub.f32 %v1141, %v1301
        %v1334 = vsub.f32 %v1142, %v1302
        %v1335 = vsub.f32 %v1143, %v1303
        %v1336 = vsub.f32 %v1144, %v1304
        %v1337 = vsub.f32 %v1145, %v1305
        %v1338 = vsub.f32 %v1146, %v1306
        %v1339 = vsub.f32 %v1147, %v1307
        %v1340 = vsub.f32 %v1148, %v1308
        %v1341 = vmax.f32 %v1325, 0.0
        %v1342 = vmax.f32 %v1326, 0.0
        %v1343 = vmax.f32 %v1327, 0.0
        %v1344 = vmax.f32 %v1328, 0.0
        %v1345 = vmax.f32 %v1329, 0.0
        %v1346 = vmax.f32 %v1330, 0.0
        %v1347 = vmax.f32 %v1331, 0.0
        %v1348 = vmax.f32 %v1332, 0.0
        %v1349 = vmax.f32 %v1333, 0.0
        %v1350 = vmax.f32 %v1334, 0.0
        %v1351 = vmax.f32 %v1335, 0.0
        %v1352 = vmax.f32 %v1336, 0.0
        %v1353 = vmax.f32 %v1337, 0.0
        %v1354 = vmax.f32 %v1338, 0.0
        %v1355 = vmax.f32 %v1339, 0.0
        %v1356 = vmax.f32 %v1340, 0.0
        %v1373 = vrot.slane %v1149, 6
        %v1374 = vrot.slane %v1150, 6
        %v1375 = vrot.slane %v1151, 6
        %v1376 = vrot.slane %v1152, 6
        %v1377 = vrot.slane %v1153, 6
        %v1378 = vrot.slane %v1154, 6
        %v1379 = vrot.slane %v1155, 6
        %v1380 = vrot.slane %v1156, 6
        %v1381 = vrot.slane %v1157, 6
        %v1382 = vrot.slane %v1158, 6
        %v1383 = vrot.slane %v1159, 6
        %v1384 = vrot.slane %v1160, 6
        %v1385 = vrot.slane %v1161, 6
        %v1386 = vrot.slane %v1162, 6
        %v1387 = vrot.slane %v1163, 6
        %v1388 = vrot.slane %v1164, 6
        %v1405 = vsub.f32 %v1149, %v1373
        %v1406 = vsub.f32 %v1150, %v1374
        %v1407 = vsub.f32 %v1151, %v1375
        %v1408 = vsub.f32 %v1152, %v1376
        %v1409 = vsub.f32 %v1153, %v1377
        %v1410 = vsub.f32 %v1154, %v1378
        %v1411 = vsub.f32 %v1155, %v1379
        %v1412 = vsub.f32 %v1156, %v1380
        %v1413 = vsub.f32 %v1157, %v1381
        %v1414 = vsub.f32 %v1158, %v1382
        %v1415 = vsub.f32 %v1159, %v1383
        %v1416 = vsub.f32 %v1160, %v1384
        %v1417 = vsub.f32 %v1161, %v1385
        %v1418 = vsub.f32 %v1162, %v1386
        %v1419 = vsub.f32 %v1163, %v1387
        %v1420 = vsub.f32 %v1164, %v1388
        %v1421 = vmax.f32 %v1405, 0.0
        %v1422 = vmax.f32 %v1406, 0.0
        %v1423 = vmax.f32 %v1407, 0.0
        %v1424 = vmax.f32 %v1408, 0.0
        %v1425 = vmax.f32 %v1409, 0.0
        %v1426 = vmax.f32 %v1410, 0.0
        %v1427 = vmax.f32 %v1411, 0.0
        %v1428 = vmax.f32 %v1412, 0.0
        %v1429 = vmax.f32 %v1413, 0.0
        %v1430 = vmax.f32 %v1414, 0.0
        %v1431 = vmax.f32 %v1415, 0.0
        %v1432 = vmax.f32 %v1416, 0.0
        %v1433 = vmax.f32 %v1417, 0.0
        %v1434 = vmax.f32 %v1418, 0.0
        %v1435 = vmax.f32 %v1419, 0.0
        %v1436 = vmax.f32 %v1420, 0.0
        %v1453 = vrot.slane %v1213, 1
        %v1454 = vrot.slane %v1214, 1
        %v1455 = vrot.slane %v1215, 1
        %v1456 = vrot.slane %v1216, 1
        %v1457 = vrot.slane %v1217, 1
        %v1458 = vrot.slane %v1218, 1
        %v1459 = vrot.slane %v1219, 1
        %v1460 = vrot.slane %v1220, 1
        %v1461 = vrot.slane %v1221, 1
        %v1462 = vrot.slane %v1222, 1
        %v1463 = vrot.slane %v1223, 1
        %v1464 = vrot.slane %v1224, 1
        %v1465 = vrot.slane %v1225, 1
        %v1466 = vrot.slane %v1226, 1
        %v1467 = vrot.slane %v1227, 1
        %v1468 = vrot.slane %v1228, 1
        %v1485 = vmul.f32 %v1213, %v1453
        %v1486 = vmul.f32 %v1214, %v1454
        %v1487 = vmul.f32 %v1215, %v1455
        %v1488 = vmul.f32 %v1216, %v1456
        %v1489 = vmul.f32 %v1217, %v1457
        %v1490 = vmul.f32 %v1218, %v1458
        %v1491 = vmul.f32 %v1219, %v1459
        %v1492 = vmul.f32 %v1220, %v1460
        %v1493 = vmul.f32 %v1221, %v1461
        %v1494 = vmul.f32 %v1222, %v1462
        %v1495 = vmul.f32 %v1223, %v1463
        %v1496 = vmul.f32 %v1224, %v1464
        %v1497 = vmul.f32 %v1225, %v1465
        %v1498 = vmul.f32 %v1226, %v1466
        %v1499 = vmul.f32 %v1227, %v1467
        %v1500 = vmul.f32 %v1228, %v1468
        %v1517 = vrot.slane %v1261, 1
        %v1518 = vrot.slane %v1262, 1
        %v1519 = vrot.slane %v1263, 1
        %v1520 = vrot.slane %v1264, 1
        %v1521 = vrot.slane %v1265, 1
        %v1522 = vrot.slane %v1266, 1
        %v1523 = vrot.slane %v1267, 1
        %v1524 = vrot.slane %v1268, 1
        %v1525 = vrot.slane %v1269, 1
        %v1526 = vrot.slane %v1270, 1
        %v1527 = vrot.slane %v1271, 1
        %v1528 = vrot.slane %v1272, 1
        %v1529 = vrot.slane %v1273, 1
        %v1530 = vrot.slane %v1274, 1
        %v1531 = vrot.slane %v1275, 1
        %v1532 = vrot.slane %v1276, 1
        %v1549 = vmul.f32 %v1261, %v1517
        %v1550 = vmul.f32 %v1262, %v1518
        %v1551 = vmul.f32 %v1263, %v1519
        %v1552 = vmul.f32 %v1264, %v1520
        %v1553 = vmul.f32 %v1265, %v1521
        %v1554 = vmul.f32 %v1266, %v1522
        %v1555 = vmul.f32 %v1267, %v1523
        %v1556 = vmul.f32 %v1268, %v1524
        %v1557 = vmul.f32 %v1269, %v1525
        %v1558 = vmul.f32 %v1270, %v1526
        %v1559 = vmul.f32 %v1271, %v1527
        %v1560 = vmul.f32 %v1272, %v1528
        %v1561 = vmul.f32 %v1273, %v1529
        %v1562 = vmul.f32 %v1274, %v1530
        %v1563 = vmul.f32 %v1275, %v1531
        %v1564 = vmul.f32 %v1276, %v1532
        %v1581 = vrot.slane %v1341, 1
        %v1582 = vrot.slane %v1342, 1
        %v1583 = vrot.slane %v1343, 1
        %v1584 = vrot.slane %v1344, 1
        %v1585 = vrot.slane %v1345, 1
        %v1586 = vrot.slane %v1346, 1
        %v1587 = vrot.slane %v1347, 1
        %v1588 = vrot.slane %v1348, 1
        %v1589 = vrot.slane %v1349, 1
        %v1590 = vrot.slane %v1350, 1
        %v1591 = vrot.slane %v1351, 1
        %v1592 = vrot.slane %v1352, 1
        %v1593 = vrot.slane %v1353, 1
        %v1594 = vrot.slane %v1354, 1
        %v1595 = vrot.slane %v1355, 1
        %v1596 = vrot.slane %v1356, 1
        %v1613 = vmul.f32 %v1341, %v1581
        %v1614 = vmul.f32 %v1342, %v1582
        %v1615 = vmul.f32 %v1343, %v1583
        %v1616 = vmul.f32 %v1344, %v1584
        %v1617 = vmul.f32 %v1345, %v1585
        %v1618 = vmul.f32 %v1346, %v1586
        %v1619 = vmul.f32 %v1347, %v1587
        %v1620 = vmul.f32 %v1348, %v1588
        %v1621 = vmul.f32 %v1349, %v1589
        %v1622 = vmul.f32 %v1350, %v1590
        %v1623 = vmul.f32 %v1351, %v1591
        %v1624 = vmul.f32 %v1352, %v1592
        %v1625 = vmul.f32 %v1353, %v1593
        %v1626 = vmul.f32 %v1354, %v1594
        %v1627 = vmul.f32 %v1355, %v1595
        %v1628 = vmul.f32 %v1356, %v1596
        %v1645 = vrot.slane %v1421, 1
        %v1646 = vrot.slane %v1422, 1
        %v1647 = vrot.slane %v1423, 1
        %v1648 = vrot.slane %v1424, 1
        %v1649 = vrot.slane %v1425, 1
        %v1650 = vrot.slane %v1426, 1
        %v1651 = vrot.slane %v1427, 1
        %v1652 = vrot.slane %v1428, 1
        %v1653 = vrot.slane %v1429, 1
        %v1654 = vrot.slane %v1430, 1
        %v1655 = vrot.slane %v1431, 1
        %v1656 = vrot.slane %v1432, 1
        %v1657 = vrot.slane %v1433, 1
        %v1658 = vrot.slane %v1434, 1
        %v1659 = vrot.slane %v1435, 1
        %v1660 = vrot.slane %v1436, 1
        %v1677 = vmul.f32 %v1421, %v1645
        %v1678 = vmul.f32 %v1422, %v1646
        %v1679 = vmul.f32 %v1423, %v1647
        %v1680 = vmul.f32 %v1424, %v1648
        %v1681 = vmul.f32 %v1425, %v1649
        %v1682 = vmul.f32 %v1426, %v1650
        %v1683 = vmul.f32 %v1427, %v1651
        %v1684 = vmul.f32 %v1428, %v1652
        %v1685 = vmul.f32 %v1429, %v1653
        %v1686 = vmul.f32 %v1430, %v1654
        %v1687 = vmul.f32 %v1431, %v1655
        %v1688 = vmul.f32 %v1432, %v1656
        %v1689 = vmul.f32 %v1433, %v1657
        %v1690 = vmul.f32 %v1434, %v1658
        %v1691 = vmul.f32 %v1435, %v1659
        %v1692 = vmul.f32 %v1436, %v1660
        %v1693 = vadd.f32 %v1677, 1e-07
        %v1694 = vadd.f32 %v1678, 1e-07
        %v1695 = vadd.f32 %v1679, 1e-07
        %v1696 = vadd.f32 %v1680, 1e-07
        %v1697 = vadd.f32 %v1681, 1e-07
        %v1698 = vadd.f32 %v1682, 1e-07
        %v1699 = vadd.f32 %v1683, 1e-07
        %v1700 = vadd.f32 %v1684, 1e-07
        %v1701 = vadd.f32 %v1685, 1e-07
        %v1702 = vadd.f32 %v1686, 1e-07
        %v1703 = vadd.f32 %v1687, 1e-07
        %v1704 = vadd.f32 %v1688, 1e-07
        %v1705 = vadd.f32 %v1689, 1e-07
        %v1706 = vadd.f32 %v1690, 1e-07
        %v1707 = vadd.f32 %v1691, 1e-07
        %v1708 = vadd.f32 %v1692, 1e-07
        %v1725 = vrot.slane %v1549, 4
        %v1726 = vrot.slane %v1550, 4
        %v1727 = vrot.slane %v1551, 4
        %v1728 = vrot.slane %v1552, 4
        %v1729 = vrot.slane %v1553, 4
        %v1730 = vrot.slane %v1554, 4
        %v1731 = vrot.slane %v1555, 4
        %v1732 = vrot.slane %v1556, 4
        %v1733 = vrot.slane %v1557, 4
        %v1734 = vrot.slane %v1558, 4
        %v1735 = vrot.slane %v1559, 4
        %v1736 = vrot.slane %v1560, 4
        %v1737 = vrot.slane %v1561, 4
        %v1738 = vrot.slane %v1562, 4
        %v1739 = vrot.slane %v1563, 4
        %v1740 = vrot.slane %v1564, 4
        %v1757 = vadd.f32 %v1485, %v1725
        %v1758 = vadd.f32 %v1486, %v1726
        %v1759 = vadd.f32 %v1487, %v1727
        %v1760 = vadd.f32 %v1488, %v1728
        %v1761 = vadd.f32 %v1489, %v1729
        %v1762 = vadd.f32 %v1490, %v1730
        %v1763 = vadd.f32 %v1491, %v1731
        %v1764 = vadd.f32 %v1492, %v1732
        %v1765 = vadd.f32 %v1493, %v1733
        %v1766 = vadd.f32 %v1494, %v1734
        %v1767 = vadd.f32 %v1495, %v1735
        %v1768 = vadd.f32 %v1496, %v1736
        %v1769 = vadd.f32 %v1497, %v1737
        %v1770 = vadd.f32 %v1498, %v1738
        %v1771 = vadd.f32 %v1499, %v1739
        %v1772 = vadd.f32 %v1500, %v1740
        %v1773 = vsub.f32 %v1757, %v1613
        %v1774 = vsub.f32 %v1758, %v1614
        %v1775 = vsub.f32 %v1759, %v1615
        %v1776 = vsub.f32 %v1760, %v1616
        %v1777 = vsub.f32 %v1761, %v1617
        %v1778 = vsub.f32 %v1762, %v1618
        %v1779 = vsub.f32 %v1763, %v1619
        %v1780 = vsub.f32 %v1764, %v1620
        %v1781 = vsub.f32 %v1765, %v1621
        %v1782 = vsub.f32 %v1766, %v1622
        %v1783 = vsub.f32 %v1767, %v1623
        %v1784 = vsub.f32 %v1768, %v1624
        %v1785 = vsub.f32 %v1769, %v1625
        %v1786 = vsub.f32 %v1770, %v1626
        %v1787 = vsub.f32 %v1771, %v1627
        %v1788 = vsub.f32 %v1772, %v1628
        %v1789 = vadd.f32 %v1773, 1e-07
        %v1790 = vadd.f32 %v1774, 1e-07
        %v1791 = vadd.f32 %v1775, 1e-07
        %v1792 = vadd.f32 %v1776, 1e-07
        %v1793 = vadd.f32 %v1777, 1e-07
        %v1794 = vadd.f32 %v1778, 1e-07
        %v1795 = vadd.f32 %v1779, 1e-07
        %v1796 = vadd.f32 %v1780, 1e-07
        %v1797 = vadd.f32 %v1781, 1e-07
        %v1798 = vadd.f32 %v1782, 1e-07
        %v1799 = vadd.f32 %v1783, 1e-07
        %v1800 = vadd.f32 %v1784, 1e-07
        %v1801 = vadd.f32 %v1785, 1e-07
        %v1802 = vadd.f32 %v1786, 1e-07
        %v1803 = vadd.f32 %v1787, 1e-07
        %v1804 = vadd.f32 %v1788, 1e-07
        %v1805 = vrcp.pop %v1789
        %v1806 = vmul.f32 %v1613, %v1805
        %v1807 = vrcp.pop %v1790
        %v1808 = vmul.f32 %v1614, %v1807
        %v1809 = vrcp.pop %v1791
        %v1810 = vmul.f32 %v1615, %v1809
        %v1811 = vrcp.pop %v1792
        %v1812 = vmul.f32 %v1616, %v1811
        %v1813 = vrcp.pop %v1793
        %v1814 = vmul.f32 %v1617, %v1813
        %v1815 = vrcp.pop %v1794
        %v1816 = vmul.f32 %v1618, %v1815
        %v1817 = vrcp.pop %v1795
        %v1818 = vmul.f32 %v1619, %v1817
        %v1819 = vrcp.pop %v1796
        %v1820 = vmul.f32 %v1620, %v1819
        %v1821 = vrcp.pop %v1797
        %v1822 = vmul.f32 %v1621, %v1821
        %v1823 = vrcp.pop %v1798
        %v1824 = vmul.f32 %v1622, %v1823
        %v1825 = vrcp.pop %v1799
        %v1826 = vmul.f32 %v1623, %v1825
        %v1827 = vrcp.pop %v1800
        %v1828 = vmul.f32 %v1624, %v1827
        %v1829 = vrcp.pop %v1801
        %v1830 = vmul.f32 %v1625, %v1829
        %v1831 = vrcp.pop %v1802
        %v1832 = vmul.f32 %v1626, %v1831
        %v1833 = vrcp.pop %v1803
        %v1834 = vmul.f32 %v1627, %v1833
        %v1835 = vrcp.pop %v1804
        %v1836 = vmul.f32 %v1628, %v1835
        %v1837 = vsub.f32 %v1693, %v1789
        %v1838 = vsub.f32 %v1694, %v1790
        %v1839 = vsub.f32 %v1695, %v1791
        %v1840 = vsub.f32 %v1696, %v1792
        %v1841 = vsub.f32 %v1697, %v1793
        %v1842 = vsub.f32 %v1698, %v1794
        %v1843 = vsub.f32 %v1699, %v1795
        %v1844 = vsub.f32 %v1700, %v1796
        %v1845 = vsub.f32 %v1701, %v1797
        %v1846 = vsub.f32 %v1702, %v1798
        %v1847 = vsub.f32 %v1703, %v1799
        %v1848 = vsub.f32 %v1704, %v1800
        %v1849 = vsub.f32 %v1705, %v1801
        %v1850 = vsub.f32 %v1706, %v1802
        %v1851 = vsub.f32 %v1707, %v1803
        %v1852 = vsub.f32 %v1708, %v1804
        %v1853 = vrcp.pop %v1693
        %v1854 = vmul.f32 %v1837, %v1853
        %v1855 = vrcp.pop %v1694
        %v1856 = vmul.f32 %v1838, %v1855
        %v1857 = vrcp.pop %v1695
        %v1858 = vmul.f32 %v1839, %v1857
        %v1859 = vrcp.pop %v1696
        %v1860 = vmul.f32 %v1840, %v1859
        %v1861 = vrcp.pop %v1697
        %v1862 = vmul.f32 %v1841, %v1861
        %v1863 = vrcp.pop %v1698
        %v1864 = vmul.f32 %v1842, %v1863
        %v1865 = vrcp.pop %v1699
        %v1866 = vmul.f32 %v1843, %v1865
        %v1867 = vrcp.pop %v1700
        %v1868 = vmul.f32 %v1844, %v1867
        %v1869 = vrcp.pop %v1701
        %v1870 = vmul.f32 %v1845, %v1869
        %v1871 = vrcp.pop %v1702
        %v1872 = vmul.f32 %v1846, %v1871
        %v1873 = vrcp.pop %v1703
        %v1874 = vmul.f32 %v1847, %v1873
        %v1875 = vrcp.pop %v1704
        %v1876 = vmul.f32 %v1848, %v1875
        %v1877 = vrcp.pop %v1705
        %v1878 = vmul.f32 %v1849, %v1877
        %v1879 = vrcp.pop %v1706
        %v1880 = vmul.f32 %v1850, %v1879
        %v1881 = vrcp.pop %v1707
        %v1882 = vmul.f32 %v1851, %v1881
        %v1883 = vrcp.pop %v1708
        %v1884 = vmul.f32 %v1852, %v1883
        %v1885 = vsub.f32 %v1806, %v1854
        %v1886 = vsub.f32 %v1808, %v1856
        %v1887 = vsub.f32 %v1810, %v1858
        %v1888 = vsub.f32 %v1812, %v1860
        %v1889 = vsub.f32 %v1814, %v1862
        %v1890 = vsub.f32 %v1816, %v1864
        %v1891 = vsub.f32 %v1818, %v1866
        %v1892 = vsub.f32 %v1820, %v1868
        %v1893 = vsub.f32 %v1822, %v1870
        %v1894 = vsub.f32 %v1824, %v1872
        %v1895 = vsub.f32 %v1826, %v1874
        %v1896 = vsub.f32 %v1828, %v1876
        %v1897 = vsub.f32 %v1830, %v1878
        %v1898 = vsub.f32 %v1832, %v1880
        %v1899 = vsub.f32 %v1834, %v1882
        %v1900 = vsub.f32 %v1836, %v1884
        %v1901 = vcvt.s32.f32 %v784
        %v1902 = vcvt.s32.f32 %v785
        %v1903 = vsub.f32 1.0, %v1885
        %v1904 = vsub.f32 1.0, %v1886
        %v1905 = vsub.f32 1.0, %v1887
        %v1906 = vsub.f32 1.0, %v1888
        %v1907 = vsub.f32 1.0, %v1889
        %v1908 = vsub.f32 1.0, %v1890
        %v1909 = vsub.f32 1.0, %v1891
        %v1910 = vsub.f32 1.0, %v1892
        %v1911 = vsub.f32 1.0, %v1893
        %v1912 = vsub.f32 1.0, %v1894
        %v1913 = vsub.f32 1.0, %v1895
        %v1914 = vsub.f32 1.0, %v1896
        %v1915 = vsub.f32 1.0, %v1897
        %v1916 = vsub.f32 1.0, %v1898
        %v1917 = vsub.f32 1.0, %v1899
        %v1918 = vsub.f32 1.0, %v1900
        %v1919 = vmul.f32 %v1903, %v545
        %v1920 = vmul.f32 %v1904, %v549
        %v1921 = vmul.f32 %v1905, %v553
        %v1922 = vmul.f32 %v1906, %v557
        %v1923 = vmul.f32 %v1907, %v561
        %v1924 = vmul.f32 %v1908, %v565
        %v1925 = vmul.f32 %v1909, %v569
        %v1926 = vmul.f32 %v1910, %v573
        %v1927 = vmul.f32 %v1911, %v577
        %v1928 = vmul.f32 %v1912, %v581
        %v1929 = vmul.f32 %v1913, %v585
        %v1930 = vmul.f32 %v1914, %v589
        %v1931 = vmul.f32 %v1915, %v593
        %v1932 = vmul.f32 %v1916, %v597
        %v1933 = vmul.f32 %v1917, %v601
        %v1934 = vmul.f32 %v1918, %v605
        %v1937 = vlaneseq
        %v1938 = vshrl.u32 %v1937, 7
        %v1939 = vsub.s32 0, %v1938
        %v1940 = vrot.slane %v1901, %v1939
        %v1941 = vlaneseq
        %v1942 = vshrl.u32 %v1941, 7
        %v1943 = vsub.s32 1, %v1942
        %v1944 = vrot.slane %v1901, %v1943
        %v1945 = vlaneseq
        %v1946 = vshrl.u32 %v1945, 7
        %v1947 = vsub.s32 2, %v1946
        %v1948 = vrot.slane %v1901, %v1947
        %v1949 = vlaneseq
        %v1950 = vshrl.u32 %v1949, 7
        %v1951 = vsub.s32 3, %v1950
        %v1952 = vrot.slane %v1901, %v1951
        %v1953 = vlaneseq
        %v1954 = vshrl.u32 %v1953, 7
        %v1955 = vsub.s32 4, %v1954
        %v1956 = vrot.slane %v1901, %v1955
        %v1957 = vlaneseq
        %v1958 = vshrl.u32 %v1957, 7
        %v1959 = vsub.s32 5, %v1958
        %v1960 = vrot.slane %v1901, %v1959
        %v1961 = vlaneseq
        %v1962 = vshrl.u32 %v1961, 7
        %v1963 = vsub.s32 6, %v1962
        %v1964 = vrot.slane %v1901, %v1963
        %v1965 = vlaneseq
        %v1966 = vshrl.u32 %v1965, 7
        %v1967 = vsub.s32 7, %v1966
        %v1968 = vrot.slane %v1901, %v1967
        %v1969 = vlaneseq
        %v1970 = vshrl.u32 %v1969, 7
        %v1971 = vsub.s32 0, %v1970
        %v1972 = vrot.slane %v1902, %v1971
        %v1973 = vlaneseq
        %v1974 = vshrl.u32 %v1973, 7
        %v1975 = vsub.s32 1, %v1974
        %v1976 = vrot.slane %v1902, %v1975
        %v1977 = vlaneseq
        %v1978 = vshrl.u32 %v1977, 7
        %v1979 = vsub.s32 2, %v1978
        %v1980 = vrot.slane %v1902, %v1979
        %v1981 = vlaneseq
        %v1982 = vshrl.u32 %v1981, 7
        %v1983 = vsub.s32 3, %v1982
        %v1984 = vrot.slane %v1902, %v1983
        %v1985 = vlaneseq
        %v1986 = vshrl.u32 %v1985, 7
        %v1987 = vsub.s32 4, %v1986
        %v1988 = vrot.slane %v1902, %v1987
        %v1989 = vlaneseq
        %v1990 = vshrl.u32 %v1989, 7
        %v1991 = vsub.s32 5, %v1990
        %v1992 = vrot.slane %v1902, %v1991
        %v1993 = vlaneseq
        %v1994 = vshrl.u32 %v1993, 7
        %v1995 = vsub.s32 6, %v1994
        %v1996 = vrot.slane %v1902, %v1995
        %v1997 = vlaneseq
        %v1998 = vshrl.u32 %v1997, 7
        %v1999 = vsub.s32 7, %v1998
        %v2000 = vrot.slane %v1902, %v1999
        %v2017 = vmul.f32 %v1919, %v1940
        %v2018 = vmul.f32 %v1920, %v1944
        %v2019 = vmul.f32 %v1921, %v1948
        %v2020 = vmul.f32 %v1922, %v1952
        %v2021 = vmul.f32 %v1923, %v1956
        %v2022 = vmul.f32 %v1924, %v1960
        %v2023 = vmul.f32 %v1925, %v1964
        %v2024 = vmul.f32 %v1926, %v1968
        %v2025 = vmul.f32 %v1927, %v1972
        %v2026 = vmul.f32 %v1928, %v1976
        %v2027 = vmul.f32 %v1929, %v1980
        %v2028 = vmul.f32 %v1930, %v1984
        %v2029 = vmul.f32 %v1931, %v1988
        %v2030 = vmul.f32 %v1932, %v1992
        %v2031 = vmul.f32 %v1933, %v1996
        %v2032 = vmul.f32 %v1934, %v2000
        %v2049 = vrot.slane %v2017, 2
        %v2050 = vrot.slane %v2018, 2
        %v2051 = vrot.slane %v2019, 2
        %v2052 = vrot.slane %v2020, 2
        %v2053 = vrot.slane %v2021, 2
        %v2054 = vrot.slane %v2022, 2
        %v2055 = vrot.slane %v2023, 2
        %v2056 = vrot.slane %v2024, 2
        %v2057 = vrot.slane %v2025, 2
        %v2058 = vrot.slane %v2026, 2
        %v2059 = vrot.slane %v2027, 2
        %v2060 = vrot.slane %v2028, 2
        %v2061 = vrot.slane %v2029, 2
        %v2062 = vrot.slane %v2030, 2
        %v2063 = vrot.slane %v2031, 2
        %v2064 = vrot.slane %v2032, 2
        %vm2081 = vcmask 1040384
        %v2082 = vsel %vm2081, %v2049, 0.0
        %v2083 = vsel %vm2081, %v2050, 0.0
        %v2084 = vadd.f32 %v2082, %v2083
        %v2085 = vsel %vm2081, %v2051, 0.0
        %v2086 = vadd.f32 %v2084, %v2085
        %v2087 = vsel %vm2081, %v2052, 0.0
        %v2088 = vadd.f32 %v2086, %v2087
        %v2089 = vsel %vm2081, %v2053, 0.0
        %v2090 = vadd.f32 %v2088, %v2089
        %v2091 = vsel %vm2081, %v2054, 0.0
        %v2092 = vadd.f32 %v2090, %v2091
        %v2093 = vsel %vm2081, %v2055, 0.0
        %v2094 = vadd.f32 %v2092, %v2093
        %v2095 = vsel %vm2081, %v2056, 0.0
        %v2096 = vadd.f32 %v2094, %v2095
        %v2097 = vsel %vm2081, %v2057, 0.0
        %v2098 = vadd.f32 %v2096, %v2097
        %v2099 = vsel %vm2081, %v2058, 0.0
        %v2100 = vadd.f32 %v2098, %v2099
        %v2101 = vsel %vm2081, %v2059, 0.0
        %v2102 = vadd.f32 %v2100, %v2101
        %v2103 = vsel %vm2081, %v2060, 0.0
        %v2104 = vadd.f32 %v2102, %v2103
        %v2105 = vsel %vm2081, %v2061, 0.0
        %v2106 = vadd.f32 %v2104, %v2105
        %v2107 = vsel %vm2081, %v2062, 0.0
        %v2108 = vadd.f32 %v2106, %v2107
        %v2109 = vsel %vm2081, %v2063, 0.0
        %v2110 = vadd.f32 %v2108, %v2109
        %v2111 = vsel %vm2081, %v2064, 0.0
        %v2112 = vadd.f32 %v2110, %v2111
        %2113 = vadd.xlane.f32.xlu0 %v2112
        %v2114 = vpop.xlane.xlu0 %2113
        %v2115 = vrot.slane %v2114, 4
        %v2116 = vadd.f32 %v2114, %v2115
        %v2117 = vrot.slane %v2116, 2
        %v2118 = vadd.f32 %v2116, %v2117
        %v2119 = vrot.slane %v2118, 1
        %v2120 = vadd.f32 %v2118, %v2119
        %s2121 = vtos %v2120
        %vm2122 = vcmp.eq.s32.totalorder %v703, 0
        %vm2123 = vcmp.eq.s32.totalorder %v703, 1
        %v2124 = vstv %s2121
        %v2125 = vsel %vm2123, %v2124, 0.0
        %v2126 = vstv %s1019
        %v2127 = vsel %vm2122, %v2126, %v2125
        %2128 = vst [vmem:[%s259] sm:$0xff] %v2127
        %s2129 = sand.u32 %s109, 1
        %s2130 = scalar_lea.sflag [#allocation4], %s2129
        %s2131 = sand.u32 %s109, 1
        %s2132 = smul.addr %s2131, 8
        %s2133 = scalar_lea.vmem [#allocation8], %s2132
        // Predicated region
        $region45: #{tpu_custom_call.1} parent=31 // pred_check
          %p2134 = pneg %p119
        $region46: #{tpu_custom_call.1} parent=31 // pred_check_branch
          %2136 = sbr.rel (%p2134) target = $region48
        $region47: #{tpu_custom_call.1} parent=31 // pred_region
          %s2138 = ssub.s32 128, 128
          %2139 = vsyncadd %s2130, %s2138
          %s2140 = smul.addr %s23, 128
          %s2141 = scalar_lea.hbm %s3, %s2140
          %s2143 = sshll.u32 %s2133, 4
          %s2144 = int_to_ptr.vmem [resolvable:$true] %s2143
          %2146 = dma.vmem_to_hbm [thread:$0]  %s2144, 128, %s2141, %s2130
        $region48: #{tpu_custom_call.1} parent=31 // pred_fallthru
          _
      $region32: #{tpu_custom_call.1} parent=5 // pred_fallthru
        _
      %p2147 = scmp.le.s32.totalorder 2, %s18
      // Predicated region
      $region49: #{tpu_custom_call.1} parent=5 // pred_check
        %p2148 = pneg %p2147
      $region50: #{tpu_custom_call.1} parent=5 // pred_check_branch
        %2150 = sbr.rel (%p2148) target = $region52
      $region51: #{tpu_custom_call.1} parent=5 // pred_region
        %s2151 = ssub.s32 %s18, 2
        // Predicated region
        $region53: #{tpu_custom_call.1} parent=51 // pred_check
          %p2152 = pneg %p125
        $region54: #{tpu_custom_call.1} parent=51 // pred_check_branch
          %2154 = sbr.rel (%p2152) target = $region56
        $region55: #{tpu_custom_call.1} parent=51 // pred_region
          %s2155 = sand.u32 %s110, 1
          %s2156 = scalar_lea.sflag [#allocation4], %s2155
          %s2157 = sand.u32 %s110, 1
          %s2158 = smul.addr %s2157, 8
          %s2159 = scalar_lea.vmem [#allocation8], %s2158
          %2160 = dma.done %s2156, 128
        $region56: #{tpu_custom_call.1} parent=51 // pred_fallthru
          _
      $region52: #{tpu_custom_call.1} parent=5 // pred_fallthru
        _
    $region6: #{tpu_custom_call.1} parent=1 // loop_footer
      %s22 = sadd.s32 1, %s18
    $region7: #{tpu_custom_call.1} parent=1 // loop_footer_branch
      %17 = sbr.rel target = $region3
    $region8: #{tpu_custom_call.1} parent=1 // loop_exit
      _
    %2161 = vsyncpa [#allocation3], 1
    %s2162 = scalar_lea.sflag [#allocation3], 1
    %2163 = vsyncpa %s2162, 1
    %2164 = vsyncpa [#allocation6], 1
    %s2165 = scalar_lea.sflag [#allocation6], 1
    %2166 = vsyncpa %s2165, 1
    %2167 = vsyncpa [#allocation4], 1
    %s2168 = scalar_lea.sflag [#allocation4], 1
    %2169 = vsyncpa %s2168, 1

</llo_original>
